<compile_context>
chip_gen: v7x
topology: tpu7x:2x2x1
jax: 0.10.0
libtpu: 0.0.40
codegen_flags: <defaults>
</compile_context>

<pallas_src>
import functools

import jax
import jax.numpy as jnp
from jax import lax
from jax.experimental import pallas as pl
from jax.experimental.pallas import tpu as pltpu

_EPS_DICE = 1e-6
_TH_MAX = 128      # H rows per tile: 13 double-buffered f32 planes + scratch stay
                   # well inside the 16/32 MiB default scoped VMEM (v5e/v6e/v7x).
_N_SUMS = 7        # n_sel, s_shift, s_param, s_bce, inter, p_sum, g_sum


def _sigmoid(x):
    # tanh form: a single EUP op instead of exp + reciprocal.
    return 0.5 * (jnp.tanh(0.5 * x) + 1.0)


def _smooth_l1(d):
    ad = jnp.abs(d)
    return jnp.where(ad < 1.0, 0.5 * d * d, ad - 0.5)


def _criterion_kernel(xscale_ref,
                      gt_shrink_ref, valid_ref, shrink_ref, cent_ref, gt_cent_ref,
                      shift_ref, gt_shift_ref, param_ref, gt_param_ref,
                      out_ref, acc_ref, *, th, height):
    t = pl.program_id(1)

    @pl.when(t == 0)
    def _init():
        acc_ref[...] = jnp.zeros_like(acc_ref)

    f32 = jnp.float32
    gt_s = gt_shrink_ref[...].astype(f32)                      # (TH, W)

    # Selection mask (gt_shrink.bool()) and valid mask.  Guard the ragged tail
    # tile explicitly when TH does not divide H (OOB block rows read garbage).
    mask = (gt_s != 0.0).astype(f32)
    valid = valid_ref[...].astype(f32)
    if height % th != 0:
        rows = lax.broadcasted_iota(jnp.int32, gt_s.shape, 0) + t * th
        inb = (rows < height).astype(f32)
        mask = mask * inb
        valid = valid * inb

    # ---- shift head: masked SmoothL1 (beta=1) over both channels ----
    # TODO(synk): criterion_shift / pred_shift are undefined in the source
    # module; implemented as masked SmoothL1 on the `shift` head.
    d0 = shift_ref[0].astype(f32) - gt_shift_ref[0].astype(f32)
    d1 = shift_ref[1].astype(f32) - gt_shift_ref[1].astype(f32)
    shift_pix = (_smooth_l1(d0) + _smooth_l1(d1)) * mask

    # ---- param head ----
    # TODO(synk): ParamLoss is an external module; implemented as masked L1 with
    # the slope channel weighted by the x_ranges width scalar.
    xs = xscale_ref[0]
    dk = jnp.abs(param_ref[0].astype(f32) - gt_param_ref[0].astype(f32)) * xs
    db = jnp.abs(param_ref[1].astype(f32) - gt_param_ref[1].astype(f32))
    param_pix = (dk + db) * mask

    # ---- centroid: BCE-with-logits applied to sigmoid(pred) (double sigmoid,
    #      faithful to the reference); stable since x = sigmoid(.) >= 0 ----
    x = _sigmoid(cent_ref[...].astype(f32))
    tgt = gt_cent_ref[...].astype(f32)
    bce_pix = (x - x * tgt + jnp.log(1.0 + jnp.exp(-x))) * mask

    # ---- shrink: Dice terms on sigmoid(shrink[:,0]) weighted by valid ----
    p = _sigmoid(shrink_ref[...].astype(f32))
    inter_pix = p * gt_s * valid
    psum_pix = p * valid
    gsum_pix = gt_s * valid

    # Element-wise (VPU-only) accumulation; the cross-lane reduce is deferred.
    acc_ref[0] += mask
    acc_ref[1] += shift_pix
    acc_ref[2] += param_pix
    acc_ref[3] += bce_pix
    acc_ref[4] += inter_pix
    acc_ref[5] += psum_pix
    acc_ref[6] += gsum_pix

    @pl.when(t == pl.num_programs(1) - 1)
    def _finalize():
        row = lax.broadcasted_iota(jnp.int32, (8, 128), 0)
        out = jnp.zeros((8, 128), f32)
        for k in range(_N_SUMS):
            sk = jnp.sum(acc_ref[k], keepdims=True)            # (1, 1)
            out = jnp.where(row == k, sk, out)
        out_ref[...] = out                                     # lane-dense store


def criterion_forward(preds, gt_labels, x_ranges):
    shrink, centroid, param, shift = preds
    gt_valid_mask, gt_shrink, gt_centroid, gt_param, gt_shift = gt_labels

    B, _, H, W = shrink.shape
    TH = H if H <= _TH_MAX else _TH_MAX
    NT = -(-H // TH)                                           # cdiv(H, TH)

    # x_ranges -> single width scalar consumed by the synthetic ParamLoss.
    xr = jnp.asarray(x_ranges, jnp.float32).reshape(-1)
    xscale = (xr[-1] - xr[0]).reshape(1)

    def spec1():   # (B, 1, H, W) -> kernel sees (TH, W)
        return pl.BlockSpec((None, None, TH, W), lambda b, t: (b, 0, t, 0))

    def spec2():   # (B, 2, H, W) -> kernel sees (2, TH, W)
        return pl.BlockSpec((None, 2, TH, W), lambda b, t: (b, 0, t, 0))

    kernel = functools.partial(_criterion_kernel, th=TH, height=H)

    grid_spec = pltpu.PrefetchScalarGridSpec(
        num_scalar_prefetch=0,
        grid=(B, NT),
        in_specs=[pl.BlockSpec(memory_space=pltpu.MemorySpace.SMEM),   # xscale
                  spec1(), spec1(), spec1(), spec1(), spec1(),
                  spec2(), spec2(), spec2(), spec2()],
        out_specs=pl.BlockSpec((None, 8, 128), lambda b, t: (b, 0, 0)),
        scratch_shapes=[pltpu.VMEM((_N_SUMS, TH, W), jnp.float32)],
    )

    n_pix = B * H * W
    in_bytes = sum(int(a.size) * a.dtype.itemsize
                   for a in (gt_shrink, gt_valid_mask, shrink, centroid,
                             gt_centroid, shift, gt_shift, param, gt_param))
    cost = pl.CostEstimate(flops=30 * n_pix,
                           transcendentals=4 * n_pix,
                           bytes_accessed=in_bytes + B * 8 * 128 * 4)

    partials = pl.pallas_call(
        kernel,
        grid_spec=grid_spec,
        out_shape=jax.ShapeDtypeStruct((B, 8, 128), jnp.float32),
        compiler_params=pltpu.CompilerParams(
            dimension_semantics=("parallel", "arbitrary")),
        cost_estimate=cost,
    )(xscale, gt_shrink, gt_valid_mask, shrink, centroid, gt_centroid,
      shift, gt_shift, param, gt_param)

    # Combine per-batch (per-core on v7x) partial sums; final scalar math is a
    # handful of f32 ops, done here in the wrapper.
    sums = jnp.sum(partials[:, :_N_SUMS, 0], axis=0)
    n_sel, s_shift, s_param, s_bce, inter, p_sum, g_sum = (
        sums[k] for k in range(_N_SUMS))
    n_safe = jnp.maximum(n_sel, 1.0)

    loss_shift = s_shift / (2.0 * n_safe)
    loss_param = s_param / (2.0 * n_safe)
    loss_centroid = s_bce / n_safe
    loss_shrink = 1.0 - 2.0 * inter / (p_sum + g_sum + _EPS_DICE)
    # TODO(synk): forward-only; wrap in jax.custom_vjp if gradients are needed.
    return loss_shift, loss_param, loss_centroid, loss_shrink


if __name__ == "__main__":
    key = jax.random.PRNGKey(0)
    B, H, W = 2, 16, 16
    ks = jax.random.split(key, 9)

    # predictions (NCHW logits / regressions)
    shrink = jax.random.normal(ks[0], (B, 1, H, W), jnp.float32)
    centroid = jax.random.normal(ks[1], (B, 1, H, W), jnp.float32)
    param = jax.random.normal(ks[2], (B, 2, H, W), jnp.float32)
    shift = jax.random.normal(ks[3], (B, 2, H, W), jnp.float32)

    # ground-truth labels
    gt_valid_mask = (jax.random.uniform(ks[4], (B, 1, H, W)) > 0.2).astype(jnp.float32)
    gt_shrink = (jax.random.uniform(ks[5], (B, 1, H, W)) > 0.5).astype(jnp.float32)
    gt_centroid = (jax.random.uniform(ks[6], (B, 1, H, W)) > 0.5).astype(jnp.float32)
    gt_param = jax.random.normal(ks[7], (B, 2, H, W), jnp.float32)
    gt_shift = jax.random.normal(ks[8], (B, 2, H, W), jnp.float32)

    x_ranges = jnp.array([0.0, float(W)], jnp.float32)

    preds = (shrink, centroid, param, shift)
    gt_labels = (gt_valid_mask, gt_shrink, gt_centroid, gt_param, gt_shift)

    losses = criterion_forward(preds, gt_labels, x_ranges)
    losses = jax.block_until_ready(losses)

    names = ("loss_shift", "loss_param", "loss_centroid", "loss_shrink")
    for name, l in zip(names, losses):
        assert bool(jnp.isfinite(l)), name
    print("KERNEL_OK")
</pallas_src>

<mosaic_0001>
module attributes {stable_mosaic.version = 11 : i64} {
  func.func @_criterion_kernel(%arg0: i32, %arg1: i32, %arg2: memref<1xf32, #tpu.memory_space<smem>>, %arg3: memref<1x1x16x16xf32, #tpu.memory_space<vmem>>, %arg4: memref<1x1x16x16xf32, #tpu.memory_space<vmem>>, %arg5: memref<1x1x16x16xf32, #tpu.memory_space<vmem>>, %arg6: memref<1x1x16x16xf32, #tpu.memory_space<vmem>>, %arg7: memref<1x1x16x16xf32, #tpu.memory_space<vmem>>, %arg8: memref<1x2x16x16xf32, #tpu.memory_space<vmem>>, %arg9: memref<1x2x16x16xf32, #tpu.memory_space<vmem>>, %arg10: memref<1x2x16x16xf32, #tpu.memory_space<vmem>>, %arg11: memref<1x2x16x16xf32, #tpu.memory_space<vmem>>, %arg12: memref<1x8x128xf32, #tpu.memory_space<vmem>>, %arg13: memref<7x16x16xf32, #tpu.memory_space<vmem>>) attributes {dimension_semantics = [#tpu.dimension_semantics<parallel>, #tpu.dimension_semantics<arbitrary>], iteration_bounds = array<i64: 2, 1>, scalar_prefetch = 0 : i64, scratch_operands = 1 : i64, tpu.core_type = #tpu.core_type<tc>, window_params = [{transform_indices = @transform_0, window_bounds = array<i64: 1>}, {transform_indices = @transform_1, window_bounds = array<i64: 1, 1, 16, 16>}, {transform_indices = @transform_2, window_bounds = array<i64: 1, 1, 16, 16>}, {transform_indices = @transform_3, window_bounds = array<i64: 1, 1, 16, 16>}, {transform_indices = @transform_4, window_bounds = array<i64: 1, 1, 16, 16>}, {transform_indices = @transform_5, window_bounds = array<i64: 1, 1, 16, 16>}, {transform_indices = @transform_6, window_bounds = array<i64: 1, 2, 16, 16>}, {transform_indices = @transform_7, window_bounds = array<i64: 1, 2, 16, 16>}, {transform_indices = @transform_8, window_bounds = array<i64: 1, 2, 16, 16>}, {transform_indices = @transform_9, window_bounds = array<i64: 1, 2, 16, 16>}, {transform_indices = @transform_10, window_bounds = array<i64: 1, 8, 128>}]} {
    %c0_i32 = arith.constant 0 : i32
    %0 = arith.cmpi eq, %arg1, %c0_i32 : i32
    %1 = arith.extui %0 : i1 to i32
    %c0_i32_0 = arith.constant 0 : i32
    %2 = arith.cmpi ne, %1, %c0_i32_0 : i32
    scf.if %2 {
      %cst_105 = arith.constant 0.000000e+00 : f32
      %137 = vector.broadcast %cst_105 : f32 to vector<7x16x16xf32>
      %c0_106 = arith.constant 0 : index
      %c0_107 = arith.constant 0 : index
      %c0_108 = arith.constant 0 : index
      %138 = vector.load %arg13[%c0_106, %c0_107, %c0_108] : memref<7x16x16xf32, #tpu.memory_space<vmem>>, vector<7x16x16xf32>
      tpu.vector_store %arg13[%c0_106, %c0_107, %c0_108], %137 {strides = array<i32>} : memref<7x16x16xf32, #tpu.memory_space<vmem>>, vector<7x16x16xf32>,
    } else {
    }
    %c0 = arith.constant 0 : index
    %c0_1 = arith.constant 0 : index
    %c0_2 = arith.constant 0 : index
    %c0_3 = arith.constant 0 : index
    %3 = vector.load %arg3[%c0, %c0_1, %c0_2, %c0_3] : memref<1x1x16x16xf32, #tpu.memory_space<vmem>>, vector<1x1x16x16xf32>
    %4 = vector.shape_cast %3 : vector<1x1x16x16xf32> to vector<16x16xf32>
    %cst = arith.constant 0.000000e+00 : f32
    %5 = vector.broadcast %cst : f32 to vector<16x16xf32>
    %6 = arith.cmpf one, %4, %5 : vector<16x16xf32>
    %7 = arith.extui %6 : vector<16x16xi1> to vector<16x16xi32>
    %8 = arith.sitofp %7 : vector<16x16xi32> to vector<16x16xf32>
    %c0_4 = arith.constant 0 : index
    %c0_5 = arith.constant 0 : index
    %c0_6 = arith.constant 0 : index
    %c0_7 = arith.constant 0 : index
    %9 = vector.load %arg4[%c0_4, %c0_5, %c0_6, %c0_7] : memref<1x1x16x16xf32, #tpu.memory_space<vmem>>, vector<1x1x16x16xf32>
    %10 = vector.shape_cast %9 : vector<1x1x16x16xf32> to vector<16x16xf32>
    %c0_8 = arith.constant 0 : index
    %c0_9 = arith.constant 0 : index
    %c0_10 = arith.constant 0 : index
    %c0_11 = arith.constant 0 : index
    %11 = vector.load %arg8[%c0_8, %c0_9, %c0_10, %c0_11] : memref<1x2x16x16xf32, #tpu.memory_space<vmem>>, vector<1x1x16x16xf32>
    %12 = vector.shape_cast %11 : vector<1x1x16x16xf32> to vector<16x16xf32>
    %c0_12 = arith.constant 0 : index
    %c0_13 = arith.constant 0 : index
    %c0_14 = arith.constant 0 : index
    %c0_15 = arith.constant 0 : index
    %13 = vector.load %arg9[%c0_12, %c0_13, %c0_14, %c0_15] : memref<1x2x16x16xf32, #tpu.memory_space<vmem>>, vector<1x1x16x16xf32>
    %14 = vector.shape_cast %13 : vector<1x1x16x16xf32> to vector<16x16xf32>
    %15 = arith.subf %12, %14 : vector<16x16xf32>
    %c0_16 = arith.constant 0 : index
    %c1 = arith.constant 1 : index
    %c0_17 = arith.constant 0 : index
    %c0_18 = arith.constant 0 : index
    %16 = vector.load %arg8[%c0_16, %c1, %c0_17, %c0_18] : memref<1x2x16x16xf32, #tpu.memory_space<vmem>>, vector<1x1x16x16xf32>
    %17 = vector.shape_cast %16 : vector<1x1x16x16xf32> to vector<16x16xf32>
    %c0_19 = arith.constant 0 : index
    %c1_20 = arith.constant 1 : index
    %c0_21 = arith.constant 0 : index
    %c0_22 = arith.constant 0 : index
    %18 = vector.load %arg9[%c0_19, %c1_20, %c0_21, %c0_22] : memref<1x2x16x16xf32, #tpu.memory_space<vmem>>, vector<1x1x16x16xf32>
    %19 = vector.shape_cast %18 : vector<1x1x16x16xf32> to vector<16x16xf32>
    %20 = arith.subf %17, %19 : vector<16x16xf32>
    %21 = math.absf %15 : vector<16x16xf32>
    %cst_23 = arith.constant 1.000000e+00 : f32
    %22 = vector.broadcast %cst_23 : f32 to vector<16x16xf32>
    %23 = arith.cmpf olt, %21, %22 : vector<16x16xf32>
    %cst_24 = arith.constant 5.000000e-01 : f32
    %24 = vector.broadcast %cst_24 : f32 to vector<16x16xf32>
    %25 = arith.mulf %24, %15 : vector<16x16xf32>
    %26 = arith.mulf %25, %15 : vector<16x16xf32>
    %cst_25 = arith.constant 5.000000e-01 : f32
    %27 = vector.broadcast %cst_25 : f32 to vector<16x16xf32>
    %28 = arith.subf %21, %27 : vector<16x16xf32>
    %29 = arith.select %23, %26, %28 : vector<16x16xi1>, vector<16x16xf32>
    %30 = math.absf %20 : vector<16x16xf32>
    %cst_26 = arith.constant 1.000000e+00 : f32
    %31 = vector.broadcast %cst_26 : f32 to vector<16x16xf32>
    %32 = arith.cmpf olt, %30, %31 : vector<16x16xf32>
    %cst_27 = arith.constant 5.000000e-01 : f32
    %33 = vector.broadcast %cst_27 : f32 to vector<16x16xf32>
    %34 = arith.mulf %33, %20 : vector<16x16xf32>
    %35 = arith.mulf %34, %20 : vector<16x16xf32>
    %cst_28 = arith.constant 5.000000e-01 : f32
    %36 = vector.broadcast %cst_28 : f32 to vector<16x16xf32>
    %37 = arith.subf %30, %36 : vector<16x16xf32>
    %38 = arith.select %32, %35, %37 : vector<16x16xi1>, vector<16x16xf32>
    %39 = arith.addf %29, %38 : vector<16x16xf32>
    %40 = arith.mulf %39, %8 : vector<16x16xf32>
    %c0_29 = arith.constant 0 : index
    %41 = memref.load %arg2[%c0_29] : memref<1xf32, #tpu.memory_space<smem>>
    %c0_30 = arith.constant 0 : index
    %c0_31 = arith.constant 0 : index
    %c0_32 = arith.constant 0 : index
    %c0_33 = arith.constant 0 : index
    %42 = vector.load %arg10[%c0_30, %c0_31, %c0_32, %c0_33] : memref<1x2x16x16xf32, #tpu.memory_space<vmem>>, vector<1x1x16x16xf32>
    %43 = vector.shape_cast %42 : vector<1x1x16x16xf32> to vector<16x16xf32>
    %c0_34 = arith.constant 0 : index
    %c0_35 = arith.constant 0 : index
    %c0_36 = arith.constant 0 : index
    %c0_37 = arith.constant 0 : index
    %44 = vector.load %arg11[%c0_34, %c0_35, %c0_36, %c0_37] : memref<1x2x16x16xf32, #tpu.memory_space<vmem>>, vector<1x1x16x16xf32>
    %45 = vector.shape_cast %44 : vector<1x1x16x16xf32> to vector<16x16xf32>
    %46 = arith.subf %43, %45 : vector<16x16xf32>
    %47 = math.absf %46 : vector<16x16xf32>
    %48 = vector.broadcast %41 : f32 to vector<16x16xf32>
    %49 = arith.mulf %47, %48 : vector<16x16xf32>
    %c0_38 = arith.constant 0 : index
    %c1_39 = arith.constant 1 : index
    %c0_40 = arith.constant 0 : index
    %c0_41 = arith.constant 0 : index
    %50 = vector.load %arg10[%c0_38, %c1_39, %c0_40, %c0_41] : memref<1x2x16x16xf32, #tpu.memory_space<vmem>>, vector<1x1x16x16xf32>
    %51 = vector.shape_cast %50 : vector<1x1x16x16xf32> to vector<16x16xf32>
    %c0_42 = arith.constant 0 : index
    %c1_43 = arith.constant 1 : index
    %c0_44 = arith.constant 0 : index
    %c0_45 = arith.constant 0 : index
    %52 = vector.load %arg11[%c0_42, %c1_43, %c0_44, %c0_45] : memref<1x2x16x16xf32, #tpu.memory_space<vmem>>, vector<1x1x16x16xf32>
    %53 = vector.shape_cast %52 : vector<1x1x16x16xf32> to vector<16x16xf32>
    %54 = arith.subf %51, %53 : vector<16x16xf32>
    %55 = math.absf %54 : vector<16x16xf32>
    %56 = arith.addf %49, %55 : vector<16x16xf32>
    %57 = arith.mulf %56, %8 : vector<16x16xf32>
    %c0_46 = arith.constant 0 : index
    %c0_47 = arith.constant 0 : index
    %c0_48 = arith.constant 0 : index
    %c0_49 = arith.constant 0 : index
    %58 = vector.load %arg6[%c0_46, %c0_47, %c0_48, %c0_49] : memref<1x1x16x16xf32, #tpu.memory_space<vmem>>, vector<1x1x16x16xf32>
    %59 = vector.shape_cast %58 : vector<1x1x16x16xf32> to vector<16x16xf32>
    %cst_50 = arith.constant 5.000000e-01 : f32
    %60 = vector.broadcast %cst_50 : f32 to vector<16x16xf32>
    %61 = arith.mulf %60, %59 : vector<16x16xf32>
    %62 = math.tanh %61 : vector<16x16xf32>
    %cst_51 = arith.constant 1.000000e+00 : f32
    %63 = vector.broadcast %cst_51 : f32 to vector<16x16xf32>
    %64 = arith.addf %62, %63 : vector<16x16xf32>
    %cst_52 = arith.constant 5.000000e-01 : f32
    %65 = vector.broadcast %cst_52 : f32 to vector<16x16xf32>
    %66 = arith.mulf %65, %64 : vector<16x16xf32>
    %c0_53 = arith.constant 0 : index
    %c0_54 = arith.constant 0 : index
    %c0_55 = arith.constant 0 : index
    %c0_56 = arith.constant 0 : index
    %67 = vector.load %arg7[%c0_53, %c0_54, %c0_55, %c0_56] : memref<1x1x16x16xf32, #tpu.memory_space<vmem>>, vector<1x1x16x16xf32>
    %68 = vector.shape_cast %67 : vector<1x1x16x16xf32> to vector<16x16xf32>
    %69 = arith.mulf %66, %68 : vector<16x16xf32>
    %70 = arith.subf %66, %69 : vector<16x16xf32>
    %cst_57 = arith.constant 0.000000e+00 : f32
    %71 = vector.broadcast %cst_57 : f32 to vector<16x16xf32>
    %72 = arith.subf %71, %66 : vector<16x16xf32>
    %73 = math.exp %72 : vector<16x16xf32>
    %cst_58 = arith.constant 1.000000e+00 : f32
    %74 = vector.broadcast %cst_58 : f32 to vector<16x16xf32>
    %75 = arith.addf %74, %73 : vector<16x16xf32>
    %76 = math.log %75 : vector<16x16xf32>
    %77 = arith.addf %70, %76 : vector<16x16xf32>
    %78 = arith.mulf %77, %8 : vector<16x16xf32>
    %c0_59 = arith.constant 0 : index
    %c0_60 = arith.constant 0 : index
    %c0_61 = arith.constant 0 : index
    %c0_62 = arith.constant 0 : index
    %79 = vector.load %arg5[%c0_59, %c0_60, %c0_61, %c0_62] : memref<1x1x16x16xf32, #tpu.memory_space<vmem>>, vector<1x1x16x16xf32>
    %80 = vector.shape_cast %79 : vector<1x1x16x16xf32> to vector<16x16xf32>
    %cst_63 = arith.constant 5.000000e-01 : f32
    %81 = vector.broadcast %cst_63 : f32 to vector<16x16xf32>
    %82 = arith.mulf %81, %80 : vector<16x16xf32>
    %83 = math.tanh %82 : vector<16x16xf32>
    %cst_64 = arith.constant 1.000000e+00 : f32
    %84 = vector.broadcast %cst_64 : f32 to vector<16x16xf32>
    %85 = arith.addf %83, %84 : vector<16x16xf32>
    %cst_65 = arith.constant 5.000000e-01 : f32
    %86 = vector.broadcast %cst_65 : f32 to vector<16x16xf32>
    %87 = arith.mulf %86, %85 : vector<16x16xf32>
    %88 = arith.mulf %87, %4 : vector<16x16xf32>
    %89 = arith.mulf %88, %10 : vector<16x16xf32>
    %90 = arith.mulf %87, %10 : vector<16x16xf32>
    %91 = arith.mulf %4, %10 : vector<16x16xf32>
    %c0_66 = arith.constant 0 : index
    %c0_67 = arith.constant 0 : index
    %c0_68 = arith.constant 0 : index
    %92 = vector.load %arg13[%c0_66, %c0_67, %c0_68] : memref<7x16x16xf32, #tpu.memory_space<vmem>>, vector<1x16x16xf32>
    %93 = vector.shape_cast %92 : vector<1x16x16xf32> to vector<16x16xf32>
    %94 = arith.addf %93, %8 : vector<16x16xf32>
    %c0_69 = arith.constant 0 : index
    %c0_70 = arith.constant 0 : index
    %c0_71 = arith.constant 0 : index
    %95 = vector.load %arg13[%c0_69, %c0_70, %c0_71] : memref<7x16x16xf32, #tpu.memory_space<vmem>>, vector<1x16x16xf32>
    %96 = vector.shape_cast %95 : vector<1x16x16xf32> to vector<16x16xf32>
    %97 = vector.shape_cast %94 : vector<16x16xf32> to vector<1x16x16xf32>
    tpu.vector_store %arg13[%c0_69, %c0_70, %c0_71], %97 {strides = array<i32>} : memref<7x16x16xf32, #tpu.memory_space<vmem>>, vector<1x16x16xf32>,
    %c1_72 = arith.constant 1 : index
    %c0_73 = arith.constant 0 : index
    %c0_74 = arith.constant 0 : index
    %98 = vector.load %arg13[%c1_72, %c0_73, %c0_74] : memref<7x16x16xf32, #tpu.memory_space<vmem>>, vector<1x16x16xf32>
    %99 = vector.shape_cast %98 : vector<1x16x16xf32> to vector<16x16xf32>
    %100 = arith.addf %99, %40 : vector<16x16xf32>
    %c1_75 = arith.constant 1 : index
    %c0_76 = arith.constant 0 : index
    %c0_77 = arith.constant 0 : index
    %101 = vector.load %arg13[%c1_75, %c0_76, %c0_77] : memref<7x16x16xf32, #tpu.memory_space<vmem>>, vector<1x16x16xf32>
    %102 = vector.shape_cast %101 : vector<1x16x16xf32> to vector<16x16xf32>
    %103 = vector.shape_cast %100 : vector<16x16xf32> to vector<1x16x16xf32>
    tpu.vector_store %arg13[%c1_75, %c0_76, %c0_77], %103 {strides = array<i32>} : memref<7x16x16xf32, #tpu.memory_space<vmem>>, vector<1x16x16xf32>,
    %c2 = arith.constant 2 : index
    %c0_78 = arith.constant 0 : index
    %c0_79 = arith.constant 0 : index
    %104 = vector.load %arg13[%c2, %c0_78, %c0_79] : memref<7x16x16xf32, #tpu.memory_space<vmem>>, vector<1x16x16xf32>
    %105 = vector.shape_cast %104 : vector<1x16x16xf32> to vector<16x16xf32>
    %106 = arith.addf %105, %57 : vector<16x16xf32>
    %c2_80 = arith.constant 2 : index
    %c0_81 = arith.constant 0 : index
    %c0_82 = arith.constant 0 : index
    %107 = vector.load %arg13[%c2_80, %c0_81, %c0_82] : memref<7x16x16xf32, #tpu.memory_space<vmem>>, vector<1x16x16xf32>
    %108 = vector.shape_cast %107 : vector<1x16x16xf32> to vector<16x16xf32>
    %109 = vector.shape_cast %106 : vector<16x16xf32> to vector<1x16x16xf32>
    tpu.vector_store %arg13[%c2_80, %c0_81, %c0_82], %109 {strides = array<i32>} : memref<7x16x16xf32, #tpu.memory_space<vmem>>, vector<1x16x16xf32>,
    %c3 = arith.constant 3 : index
    %c0_83 = arith.constant 0 : index
    %c0_84 = arith.constant 0 : index
    %110 = vector.load %arg13[%c3, %c0_83, %c0_84] : memref<7x16x16xf32, #tpu.memory_space<vmem>>, vector<1x16x16xf32>
    %111 = vector.shape_cast %110 : vector<1x16x16xf32> to vector<16x16xf32>
    %112 = arith.addf %111, %78 : vector<16x16xf32>
    %c3_85 = arith.constant 3 : index
    %c0_86 = arith.constant 0 : index
    %c0_87 = arith.constant 0 : index
    %113 = vector.load %arg13[%c3_85, %c0_86, %c0_87] : memref<7x16x16xf32, #tpu.memory_space<vmem>>, vector<1x16x16xf32>
    %114 = vector.shape_cast %113 : vector<1x16x16xf32> to vector<16x16xf32>
    %115 = vector.shape_cast %112 : vector<16x16xf32> to vector<1x16x16xf32>
    tpu.vector_store %arg13[%c3_85, %c0_86, %c0_87], %115 {strides = array<i32>} : memref<7x16x16xf32, #tpu.memory_space<vmem>>, vector<1x16x16xf32>,
    %c4 = arith.constant 4 : index
    %c0_88 = arith.constant 0 : index
    %c0_89 = arith.constant 0 : index
    %116 = vector.load %arg13[%c4, %c0_88, %c0_89] : memref<7x16x16xf32, #tpu.memory_space<vmem>>, vector<1x16x16xf32>
    %117 = vector.shape_cast %116 : vector<1x16x16xf32> to vector<16x16xf32>
    %118 = arith.addf %117, %89 : vector<16x16xf32>
    %c4_90 = arith.constant 4 : index
    %c0_91 = arith.constant 0 : index
    %c0_92 = arith.constant 0 : index
    %119 = vector.load %arg13[%c4_90, %c0_91, %c0_92] : memref<7x16x16xf32, #tpu.memory_space<vmem>>, vector<1x16x16xf32>
    %120 = vector.shape_cast %119 : vector<1x16x16xf32> to vector<16x16xf32>
    %121 = vector.shape_cast %118 : vector<16x16xf32> to vector<1x16x16xf32>
    tpu.vector_store %arg13[%c4_90, %c0_91, %c0_92], %121 {strides = array<i32>} : memref<7x16x16xf32, #tpu.memory_space<vmem>>, vector<1x16x16xf32>,
    %c5 = arith.constant 5 : index
    %c0_93 = arith.constant 0 : index
    %c0_94 = arith.constant 0 : index
    %122 = vector.load %arg13[%c5, %c0_93, %c0_94] : memref<7x16x16xf32, #tpu.memory_space<vmem>>, vector<1x16x16xf32>
    %123 = vector.shape_cast %122 : vector<1x16x16xf32> to vector<16x16xf32>
    %124 = arith.addf %123, %90 : vector<16x16xf32>
    %c5_95 = arith.constant 5 : index
    %c0_96 = arith.constant 0 : index
    %c0_97 = arith.constant 0 : index
    %125 = vector.load %arg13[%c5_95, %c0_96, %c0_97] : memref<7x16x16xf32, #tpu.memory_space<vmem>>, vector<1x16x16xf32>
    %126 = vector.shape_cast %125 : vector<1x16x16xf32> to vector<16x16xf32>
    %127 = vector.shape_cast %124 : vector<16x16xf32> to vector<1x16x16xf32>
    tpu.vector_store %arg13[%c5_95, %c0_96, %c0_97], %127 {strides = array<i32>} : memref<7x16x16xf32, #tpu.memory_space<vmem>>, vector<1x16x16xf32>,
    %c6 = arith.constant 6 : index
    %c0_98 = arith.constant 0 : index
    %c0_99 = arith.constant 0 : index
    %128 = vector.load %arg13[%c6, %c0_98, %c0_99] : memref<7x16x16xf32, #tpu.memory_space<vmem>>, vector<1x16x16xf32>
    %129 = vector.shape_cast %128 : vector<1x16x16xf32> to vector<16x16xf32>
    %130 = arith.addf %129, %91 : vector<16x16xf32>
    %c6_100 = arith.constant 6 : index
    %c0_101 = arith.constant 0 : index
    %c0_102 = arith.constant 0 : index
    %131 = vector.load %arg13[%c6_100, %c0_101, %c0_102] : memref<7x16x16xf32, #tpu.memory_space<vmem>>, vector<1x16x16xf32>
    %132 = vector.shape_cast %131 : vector<1x16x16xf32> to vector<16x16xf32>
    %133 = vector.shape_cast %130 : vector<16x16xf32> to vector<1x16x16xf32>
    tpu.vector_store %arg13[%c6_100, %c0_101, %c0_102], %133 {strides = array<i32>} : memref<7x16x16xf32, #tpu.memory_space<vmem>>, vector<1x16x16xf32>,
    %c0_i32_103 = arith.constant 0 : i32
    %134 = arith.cmpi eq, %arg1, %c0_i32_103 : i32
    %135 = arith.extui %134 : i1 to i32
    %c0_i32_104 = arith.constant 0 : i32
    %136 = arith.cmpi ne, %135, %c0_i32_104 : i32
    scf.if %136 {
      %137 = tpu.iota {dimensions = array<i32: 0>} : vector<8x128xi32>
      %cst_105 = arith.constant 0.000000e+00 : f32
      %138 = vector.broadcast %cst_105 : f32 to vector<8x128xf32>
      %c0_106 = arith.constant 0 : index
      %c0_107 = arith.constant 0 : index
      %c0_108 = arith.constant 0 : index
      %139 = vector.load %arg13[%c0_106, %c0_107, %c0_108] : memref<7x16x16xf32, #tpu.memory_space<vmem>>, vector<1x16x16xf32>
      %140 = vector.shape_cast %139 : vector<1x16x16xf32> to vector<16x16xf32>
      %141 = vector.shape_cast %140 : vector<16x16xf32> to vector<1x16x16xf32>
      %cst_109 = arith.constant dense<0.000000e+00> : vector<1xf32>
      %142 = vector.multi_reduction <add>, %141, %cst_109 [1, 2] : vector<1x16x16xf32> to vector<1xf32>
      %143 = vector.shape_cast %142 : vector<1xf32> to vector<1x1x1xf32>
      %144 = vector.extract %143[0, 0, 0] : f32 from vector<1x1x1xf32>
      %145 = vector.broadcast %144 : f32 to vector<1x1xf32>
      %c0_i32_110 = arith.constant 0 : i32
      %146 = vector.broadcast %c0_i32_110 : i32 to vector<8x128xi32>
      %147 = arith.cmpi eq, %137, %146 : vector<8x128xi32>
      %148 = vector.shape_cast %145 : vector<1x1xf32> to vector<1x1xf32>
      %149 = vector.broadcast %148 : vector<1x1xf32> to vector<8x128xf32>
      %150 = arith.select %147, %149, %138 : vector<8x128xi1>, vector<8x128xf32>
      %c1_111 = arith.constant 1 : index
      %c0_112 = arith.constant 0 : index
      %c0_113 = arith.constant 0 : index
      %151 = vector.load %arg13[%c1_111, %c0_112, %c0_113] : memref<7x16x16xf32, #tpu.memory_space<vmem>>, vector<1x16x16xf32>
      %152 = vector.shape_cast %151 : vector<1x16x16xf32> to vector<16x16xf32>
      %153 = vector.shape_cast %152 : vector<16x16xf32> to vector<1x16x16xf32>
      %cst_114 = arith.constant dense<0.000000e+00> : vector<1xf32>
      %154 = vector.multi_reduction <add>, %153, %cst_114 [1, 2] : vector<1x16x16xf32> to vector<1xf32>
      %155 = vector.shape_cast %154 : vector<1xf32> to vector<1x1x1xf32>
      %156 = vector.extract %155[0, 0, 0] : f32 from vector<1x1x1xf32>
      %157 = vector.broadcast %156 : f32 to vector<1x1xf32>
      %c1_i32 = arith.constant 1 : i32
      %158 = vector.broadcast %c1_i32 : i32 to vector<8x128xi32>
      %159 = arith.cmpi eq, %137, %158 : vector<8x128xi32>
      %160 = vector.shape_cast %157 : vector<1x1xf32> to vector<1x1xf32>
      %161 = vector.broadcast %160 : vector<1x1xf32> to vector<8x128xf32>
      %162 = arith.select %159, %161, %150 : vector<8x128xi1>, vector<8x128xf32>
      %c2_115 = arith.constant 2 : index
      %c0_116 = arith.constant 0 : index
      %c0_117 = arith.constant 0 : index
      %163 = vector.load %arg13[%c2_115, %c0_116, %c0_117] : memref<7x16x16xf32, #tpu.memory_space<vmem>>, vector<1x16x16xf32>
      %164 = vector.shape_cast %163 : vector<1x16x16xf32> to vector<16x16xf32>
      %165 = vector.shape_cast %164 : vector<16x16xf32> to vector<1x16x16xf32>
      %cst_118 = arith.constant dense<0.000000e+00> : vector<1xf32>
      %166 = vector.multi_reduction <add>, %165, %cst_118 [1, 2] : vector<1x16x16xf32> to vector<1xf32>
      %167 = vector.shape_cast %166 : vector<1xf32> to vector<1x1x1xf32>
      %168 = vector.extract %167[0, 0, 0] : f32 from vector<1x1x1xf32>
      %169 = vector.broadcast %168 : f32 to vector<1x1xf32>
      %c2_i32 = arith.constant 2 : i32
      %170 = vector.broadcast %c2_i32 : i32 to vector<8x128xi32>
      %171 = arith.cmpi eq, %137, %170 : vector<8x128xi32>
      %172 = vector.shape_cast %169 : vector<1x1xf32> to vector<1x1xf32>
      %173 = vector.broadcast %172 : vector<1x1xf32> to vector<8x128xf32>
      %174 = arith.select %171, %173, %162 : vector<8x128xi1>, vector<8x128xf32>
      %c3_119 = arith.constant 3 : index
      %c0_120 = arith.constant 0 : index
      %c0_121 = arith.constant 0 : index
      %175 = vector.load %arg13[%c3_119, %c0_120, %c0_121] : memref<7x16x16xf32, #tpu.memory_space<vmem>>, vector<1x16x16xf32>
      %176 = vector.shape_cast %175 : vector<1x16x16xf32> to vector<16x16xf32>
      %177 = vector.shape_cast %176 : vector<16x16xf32> to vector<1x16x16xf32>
      %cst_122 = arith.constant dense<0.000000e+00> : vector<1xf32>
      %178 = vector.multi_reduction <add>, %177, %cst_122 [1, 2] : vector<1x16x16xf32> to vector<1xf32>
      %179 = vector.shape_cast %178 : vector<1xf32> to vector<1x1x1xf32>
      %180 = vector.extract %179[0, 0, 0] : f32 from vector<1x1x1xf32>
      %181 = vector.broadcast %180 : f32 to vector<1x1xf32>
      %c3_i32 = arith.constant 3 : i32
      %182 = vector.broadcast %c3_i32 : i32 to vector<8x128xi32>
      %183 = arith.cmpi eq, %137, %182 : vector<8x128xi32>
      %184 = vector.shape_cast %181 : vector<1x1xf32> to vector<1x1xf32>
      %185 = vector.broadcast %184 : vector<1x1xf32> to vector<8x128xf32>
      %186 = arith.select %183, %185, %174 : vector<8x128xi1>, vector<8x128xf32>
      %c4_123 = arith.constant 4 : index
      %c0_124 = arith.constant 0 : index
      %c0_125 = arith.constant 0 : index
      %187 = vector.load %arg13[%c4_123, %c0_124, %c0_125] : memref<7x16x16xf32, #tpu.memory_space<vmem>>, vector<1x16x16xf32>
      %188 = vector.shape_cast %187 : vector<1x16x16xf32> to vector<16x16xf32>
      %189 = vector.shape_cast %188 : vector<16x16xf32> to vector<1x16x16xf32>
      %cst_126 = arith.constant dense<0.000000e+00> : vector<1xf32>
      %190 = vector.multi_reduction <add>, %189, %cst_126 [1, 2] : vector<1x16x16xf32> to vector<1xf32>
      %191 = vector.shape_cast %190 : vector<1xf32> to vector<1x1x1xf32>
      %192 = vector.extract %191[0, 0, 0] : f32 from vector<1x1x1xf32>
      %193 = vector.broadcast %192 : f32 to vector<1x1xf32>
      %c4_i32 = arith.constant 4 : i32
      %194 = vector.broadcast %c4_i32 : i32 to vector<8x128xi32>
      %195 = arith.cmpi eq, %137, %194 : vector<8x128xi32>
      %196 = vector.shape_cast %193 : vector<1x1xf32> to vector<1x1xf32>
      %197 = vector.broadcast %196 : vector<1x1xf32> to vector<8x128xf32>
      %198 = arith.select %195, %197, %186 : vector<8x128xi1>, vector<8x128xf32>
      %c5_127 = arith.constant 5 : index
      %c0_128 = arith.constant 0 : index
      %c0_129 = arith.constant 0 : index
      %199 = vector.load %arg13[%c5_127, %c0_128, %c0_129] : memref<7x16x16xf32, #tpu.memory_space<vmem>>, vector<1x16x16xf32>
      %200 = vector.shape_cast %199 : vector<1x16x16xf32> to vector<16x16xf32>
      %201 = vector.shape_cast %200 : vector<16x16xf32> to vector<1x16x16xf32>
      %cst_130 = arith.constant dense<0.000000e+00> : vector<1xf32>
      %202 = vector.multi_reduction <add>, %201, %cst_130 [1, 2] : vector<1x16x16xf32> to vector<1xf32>
      %203 = vector.shape_cast %202 : vector<1xf32> to vector<1x1x1xf32>
      %204 = vector.extract %203[0, 0, 0] : f32 from vector<1x1x1xf32>
      %205 = vector.broadcast %204 : f32 to vector<1x1xf32>
      %c5_i32 = arith.constant 5 : i32
      %206 = vector.broadcast %c5_i32 : i32 to vector<8x128xi32>
      %207 = arith.cmpi eq, %137, %206 : vector<8x128xi32>
      %208 = vector.shape_cast %205 : vector<1x1xf32> to vector<1x1xf32>
      %209 = vector.broadcast %208 : vector<1x1xf32> to vector<8x128xf32>
      %210 = arith.select %207, %209, %198 : vector<8x128xi1>, vector<8x128xf32>
      %c6_131 = arith.constant 6 : index
      %c0_132 = arith.constant 0 : index
      %c0_133 = arith.constant 0 : index
      %211 = vector.load %arg13[%c6_131, %c0_132, %c0_133] : memref<7x16x16xf32, #tpu.memory_space<vmem>>, vector<1x16x16xf32>
      %212 = vector.shape_cast %211 : vector<1x16x16xf32> to vector<16x16xf32>
      %213 = vector.shape_cast %212 : vector<16x16xf32> to vector<1x16x16xf32>
      %cst_134 = arith.constant dense<0.000000e+00> : vector<1xf32>
      %214 = vector.multi_reduction <add>, %213, %cst_134 [1, 2] : vector<1x16x16xf32> to vector<1xf32>
      %215 = vector.shape_cast %214 : vector<1xf32> to vector<1x1x1xf32>
      %216 = vector.extract %215[0, 0, 0] : f32 from vector<1x1x1xf32>
      %217 = vector.broadcast %216 : f32 to vector<1x1xf32>
      %c6_i32 = arith.constant 6 : i32
      %218 = vector.broadcast %c6_i32 : i32 to vector<8x128xi32>
      %219 = arith.cmpi eq, %137, %218 : vector<8x128xi32>
      %220 = vector.shape_cast %217 : vector<1x1xf32> to vector<1x1xf32>
      %221 = vector.broadcast %220 : vector<1x1xf32> to vector<8x128xf32>
      %222 = arith.select %219, %221, %210 : vector<8x128xi1>, vector<8x128xf32>
      %c0_135 = arith.constant 0 : index
      %c0_136 = arith.constant 0 : index
      %c0_137 = arith.constant 0 : index
      %223 = vector.load %arg12[%c0_135, %c0_136, %c0_137] : memref<1x8x128xf32, #tpu.memory_space<vmem>>, vector<1x8x128xf32>
      %224 = vector.shape_cast %223 : vector<1x8x128xf32> to vector<8x128xf32>
      %225 = vector.shape_cast %222 : vector<8x128xf32> to vector<1x8x128xf32>
      tpu.vector_store %arg12[%c0_135, %c0_136, %c0_137], %225 {strides = array<i32>} : memref<1x8x128xf32, #tpu.memory_space<vmem>>, vector<1x8x128xf32>,
    } else {
    }
    return
  }
  func.func @transform_0(%arg0: i32, %arg1: i32) -> i32 {
    %c0_i32 = arith.constant 0 : i32
    %c0_i32_0 = arith.constant 0 : i32
    return %c0_i32 : i32
  }
  func.func @transform_1(%arg0: i32, %arg1: i32) -> (i32, i32, i32, i32) {
    %c0_i32 = arith.constant 0 : i32
    %c0_i32_0 = arith.constant 0 : i32
    %c0_i32_1 = arith.constant 0 : i32
    return %arg0, %c0_i32, %arg1, %c0_i32_0 : i32, i32, i32, i32
  }
  func.func @transform_2(%arg0: i32, %arg1: i32) -> (i32, i32, i32, i32) {
    %c0_i32 = arith.constant 0 : i32
    %c0_i32_0 = arith.constant 0 : i32
    %c0_i32_1 = arith.constant 0 : i32
    return %arg0, %c0_i32, %arg1, %c0_i32_0 : i32, i32, i32, i32
  }
  func.func @transform_3(%arg0: i32, %arg1: i32) -> (i32, i32, i32, i32) {
    %c0_i32 = arith.constant 0 : i32
    %c0_i32_0 = arith.constant 0 : i32
    %c0_i32_1 = arith.constant 0 : i32
    return %arg0, %c0_i32, %arg1, %c0_i32_0 : i32, i32, i32, i32
  }
  func.func @transform_4(%arg0: i32, %arg1: i32) -> (i32, i32, i32, i32) {
    %c0_i32 = arith.constant 0 : i32
    %c0_i32_0 = arith.constant 0 : i32
    %c0_i32_1 = arith.constant 0 : i32
    return %arg0, %c0_i32, %arg1, %c0_i32_0 : i32, i32, i32, i32
  }
  func.func @transform_5(%arg0: i32, %arg1: i32) -> (i32, i32, i32, i32) {
    %c0_i32 = arith.constant 0 : i32
    %c0_i32_0 = arith.constant 0 : i32
    %c0_i32_1 = arith.constant 0 : i32
    return %arg0, %c0_i32, %arg1, %c0_i32_0 : i32, i32, i32, i32
  }
  func.func @transform_6(%arg0: i32, %arg1: i32) -> (i32, i32, i32, i32) {
    %c0_i32 = arith.constant 0 : i32
    %c0_i32_0 = arith.constant 0 : i32
    %c0_i32_1 = arith.constant 0 : i32
    return %arg0, %c0_i32, %arg1, %c0_i32_0 : i32, i32, i32, i32
  }
  func.func @transform_7(%arg0: i32, %arg1: i32) -> (i32, i32, i32, i32) {
    %c0_i32 = arith.constant 0 : i32
    %c0_i32_0 = arith.constant 0 : i32
    %c0_i32_1 = arith.constant 0 : i32
    return %arg0, %c0_i32, %arg1, %c0_i32_0 : i32, i32, i32, i32
  }
  func.func @transform_8(%arg0: i32, %arg1: i32) -> (i32, i32, i32, i32) {
    %c0_i32 = arith.constant 0 : i32
    %c0_i32_0 = arith.constant 0 : i32
    %c0_i32_1 = arith.constant 0 : i32
    return %arg0, %c0_i32, %arg1, %c0_i32_0 : i32, i32, i32, i32
  }
  func.func @transform_9(%arg0: i32, %arg1: i32) -> (i32, i32, i32, i32) {
    %c0_i32 = arith.constant 0 : i32
    %c0_i32_0 = arith.constant 0 : i32
    %c0_i32_1 = arith.constant 0 : i32
    return %arg0, %c0_i32, %arg1, %c0_i32_0 : i32, i32, i32, i32
  }
  func.func @transform_10(%arg0: i32, %arg1: i32) -> (i32, i32, i32) {
    %c0_i32 = arith.constant 0 : i32
    %c0_i32_0 = arith.constant 0 : i32
    %c0_i32_1 = arith.constant 0 : i32
    return %arg0, %c0_i32, %c0_i32_0 : i32, i32, i32
  }
}

</mosaic_0001>

<llo_original>
// kernel: tpu_custom_call.1
$region0: #{tpu_custom_call.1}
  #allocation0 [shape = 'u32[]', space=smem, size = 0x4, offset = 0x4, fixed_abs, tag = 'smem constant byte address 0x4 - core index']
  #allocation1 [shape = 'u32[144,128]{1,0:T(1,128)}', space=vmem, size = 0x12000, scoped, tag = 'internal scratch']
  #allocation2 [shape = 'f32[7,16,16]{2,1,0:T(8,128)}', space=vmem, size = 0xe000, scoped, tag = 'scratch operand']
  #allocation3 [shape = 'f32[1]{0:T(128)S(6)}', space=smem, size = 0x200, scoped, tag = 'scoped memory for tpu_custom_call.1']
  %s0 = inlined_call_operand.<no memory space> [shape: f32[1], index: 0, kind: input, shape index: {}]
  %s1 = inlined_call_operand.hbm [shape: f32[2,1,16,16], index: 1, kind: input, shape index: {}]
  %s2 = inlined_call_operand.hbm [shape: f32[2,1,16,16], index: 2, kind: input, shape index: {}]
  %s3 = inlined_call_operand.hbm [shape: f32[2,1,16,16], index: 3, kind: input, shape index: {}]
  %s4 = inlined_call_operand.hbm [shape: f32[2,1,16,16], index: 4, kind: input, shape index: {}]
  %s5 = inlined_call_operand.hbm [shape: f32[2,1,16,16], index: 5, kind: input, shape index: {}]
  %s6 = inlined_call_operand.hbm [shape: f32[2,2,16,16], index: 6, kind: input, shape index: {}]
  %s7 = inlined_call_operand.hbm [shape: f32[2,2,16,16], index: 7, kind: input, shape index: {}]
  %s8 = inlined_call_operand.hbm [shape: f32[2,2,16,16], index: 8, kind: input, shape index: {}]
  %s9 = inlined_call_operand.hbm [shape: f32[2,2,16,16], index: 9, kind: input, shape index: {}]
  %s10 = inlined_call_operand.hbm [shape: f32[2,8,128], index: 10, kind: output, shape index: {}]
  %s11 = sld [smem:[#allocation0]]
  $region117: #{tpu_custom_call.1} parent=0
    _
  %s13 = ssub.s32 1, %s11
  %s14 = scalar_select 0, %s13, %s11
  %15 = sst [smem:[#allocation3]] %s0
  $region1: #{tpu_custom_call.1} parent=0
    #allocation4 [shape = 'u8[16384]{0}', space=vmem, size = 0x4000, scoped, tag = 'input window, operand 1']
    #allocation5 [shape = 's32[2]{0}', space=sflag, size = 0x8, scoped, tag = 'scoped memory for tpu_custom_call.1']
    #allocation6 [shape = 's32[2]{0}', space=sflag, size = 0x8, scoped, tag = 'scoped memory for tpu_custom_call.1']
    #allocation7 [shape = 'u8[16384]{0}', space=vmem, size = 0x4000, scoped, tag = 'input window, operand 2']
    #allocation8 [shape = 's32[2]{0}', space=sflag, size = 0x8, scoped, tag = 'scoped memory for tpu_custom_call.1']
    #allocation9 [shape = 'u8[16384]{0}', space=vmem, size = 0x4000, scoped, tag = 'input window, operand 3']
    #allocation10 [shape = 'u8[16384]{0}', space=vmem, size = 0x4000, scoped, tag = 'input window, operand 4']
    #allocation11 [shape = 's32[2]{0}', space=sflag, size = 0x8, scoped, tag = 'scoped memory for tpu_custom_call.1']
    #allocation12 [shape = 'u8[16384]{0}', space=vmem, size = 0x4000, scoped, tag = 'input window, operand 5']
    #allocation13 [shape = 'u8[32768]{0}', space=vmem, size = 0x8000, scoped, tag = 'input window, operand 6']
    #allocation14 [shape = 's32[2]{0}', space=sflag, size = 0x8, scoped, tag = 'scoped memory for tpu_custom_call.1']
    #allocation15 [shape = 'u8[32768]{0}', space=vmem, size = 0x8000, scoped, tag = 'input window, operand 7']
    #allocation16 [shape = 'u8[32768]{0}', space=vmem, size = 0x8000, scoped, tag = 'input window, operand 8']
    #allocation17 [shape = 's32[2]{0}', space=sflag, size = 0x8, scoped, tag = 'scoped memory for tpu_custom_call.1']
    #allocation18 [shape = 'u8[32768]{0}', space=vmem, size = 0x8000, scoped, tag = 'input window, operand 9']
    #allocation19 [shape = 'u8[8192]{0}', space=vmem, size = 0x2000, scoped, tag = 'output window, operand 0']
    %16 = vsyncpa [#allocation5], 0
    %s17 = scalar_lea.sflag [#allocation5], 1
    %18 = vsyncpa %s17, 0
    %19 = vsyncpa [#allocation8], 0
    %s20 = scalar_lea.sflag [#allocation8], 1
    %21 = vsyncpa %s20, 0
    %22 = vsyncpa [#allocation11], 0
    %s23 = scalar_lea.sflag [#allocation11], 1
    %24 = vsyncpa %s23, 0
    %25 = vsyncpa [#allocation14], 0
    %s26 = scalar_lea.sflag [#allocation14], 1
    %27 = vsyncpa %s26, 0
    %28 = vsyncpa [#allocation17], 0
    %s29 = scalar_lea.sflag [#allocation17], 1
    %30 = vsyncpa %s29, 0
    %31 = vsyncpa [#allocation6], 0
    %s32 = scalar_lea.sflag [#allocation6], 1
    %33 = vsyncpa %s32, 0
    loop: start=0, step=1, limit=4
    $region2: #{tpu_custom_call.1} parent=1 // loop_pre_header
      _
    $region3: #{tpu_custom_call.1} parent=1 // loop_header
      %s35 = sphi 0, %s39
      %p36 = scmp.ge.s32.totalorder %s35, 4
      %s42 = sphi 0, %s54
      %s43 = sphi 0, %s50
      %s44 = sphi 0, %s42
      %s45 = sphi 0, %s43
      %s46 = sphi 0, %s44
      %s47 = sphi 0, %s45
      %s55 = sphi 0, %s55
      %s57 = sphi 0, %s55
      %s58 = sphi 0, %s57
      %s72 = sphi 0, %s58
      %s80 = sphi 0, %s82
      %s83 = sphi 0, %s80
      %s84 = sphi 0, %s83
      %s100 = sphi 0, %s84
      %s108 = sphi 0, %s110
      %s111 = sphi 0, %s108
      %s112 = sphi 0, %s111
      %s128 = sphi 0, %s112
      %s136 = sphi 0, %s138
      %s139 = sphi 0, %s136
      %s140 = sphi 0, %s139
      %s156 = sphi 0, %s140
      %s164 = sphi 0, %s166
      %s167 = sphi 0, %s164
      %s168 = sphi 0, %s167
      %s184 = sphi 0, %s168
      %s192 = sphi 0, %s194
      %s195 = sphi 0, %s192
      %s196 = sphi 0, %s195
      %s212 = sphi 0, %s196
      %s220 = sphi 0, %s222
      %s223 = sphi 0, %s220
      %s224 = sphi 0, %s223
      %s240 = sphi 0, %s224
      %s248 = sphi 0, %s250
      %s251 = sphi 0, %s248
      %s252 = sphi 0, %s251
      %s268 = sphi 0, %s252
      %s276 = sphi 0, %s278
      %s279 = sphi 0, %s276
      %s280 = sphi 0, %s279
      %s296 = sphi 0, %s280
      %s304 = sphi 0, %s306
      %s307 = sphi 0, %s304
      %s308 = sphi 0, %s307
      %s324 = sphi 0, %s308
      %s330 = sphi 0, %s332
      %s333 = sphi 0, %s330
      %s334 = sphi 0, %s333
      %s350 = sphi 0, %s334
    $region4: #{tpu_custom_call.1} parent=1 // loop_header_branch
      %38 = sbr.rel (%p36) target = $region8
    $region5: #{tpu_custom_call.1} parent=1 // loop_body
      %s40 = ssub.s32 %s35, 1
      %s41 = ssub.s32 %s35, 2
      %s48 = sadd.s32 1, %s43
      %p49 = scmp.ge.s32.totalorder %s48, 1
      %s50 = scalar_select %p49, 0, %s48
      %s51 = sadd.s32 1, %s42
      %s52 = scalar_select %p49, %s51, %s42
      %p53 = scmp.ge.s32.totalorder %s52, 2
      %s54 = scalar_select %p53, 0, %s52
      %s56 = sadd.s32 %s55, 1
      %p59 = scmp.eq.s32.totalorder %s35, 1
      %p60 = scmp.ne.s32.totalorder %s55, %s57
      %p61 = scmp.eq.s32.totalorder %s35, 0
      %p62 = por %p60, %p61
      %p63 = scmp.ne.s32.totalorder %s55, %s57
      %p64 = scmp.eq.s32.totalorder %s40, 1
      %p65 = por %p63, %p64
      %p66 = scmp.ne.s32.totalorder %s57, %s58
      %p67 = scmp.eq.s32.totalorder %s40, 0
      %p68 = por %p66, %p67
      %p69 = scmp.ne.s32.totalorder %s57, %s58
      %p70 = scmp.eq.s32.totalorder %s41, 1
      %p71 = por %p69, %p70
      %p73 = scmp.ne.s32.totalorder %s58, %s72
      %p74 = scmp.eq.s32.totalorder %s41, 0
      %p75 = por %p73, %p74
      %s76 = ssub.s32 %s42, %s54
      %s77 = ssub.s32 %s43, %s50
      %s78 = sor.u32 %s76, %s77
      %p79 = scmp.eq.s32.totalorder %s78, 0
      %s81 = sadd.s32 %s80, 1
      %s82 = scalar_select %p79, %s80, %s81
      %p85 = pneg %p79
      %p86 = scmp.eq.s32.totalorder %s35, 1
      %p87 = por %p85, %p86
      %p88 = scmp.ne.s32.totalorder %s80, %s83
      %p89 = scmp.eq.s32.totalorder %s35, 0
      %p90 = por %p88, %p89
      %p91 = scmp.ne.s32.totalorder %s80, %s83
      %p92 = scmp.eq.s32.totalorder %s40, 1
      %p93 = por %p91, %p92
      %p94 = scmp.ne.s32.totalorder %s83, %s84
      %p95 = scmp.eq.s32.totalorder %s40, 0
      %p96 = por %p94, %p95
      %p97 = scmp.ne.s32.totalorder %s83, %s84
      %p98 = scmp.eq.s32.totalorder %s41, 1
      %p99 = por %p97, %p98
      %p101 = scmp.ne.s32.totalorder %s84, %s100
      %p102 = scmp.eq.s32.totalorder %s41, 0
      %p103 = por %p101, %p102
      %s104 = ssub.s32 %s42, %s54
      %s105 = ssub.s32 %s43, %s50
      %s106 = sor.u32 %s104, %s105
      %p107 = scmp.eq.s32.totalorder %s106, 0
      %s109 = sadd.s32 %s108, 1
      %s110 = scalar_select %p107, %s108, %s109
      %p113 = pneg %p107
      %p114 = scmp.eq.s32.totalorder %s35, 1
      %p115 = por %p113, %p114
      %p116 = scmp.ne.s32.totalorder %s108, %s111
      %p117 = scmp.eq.s32.totalorder %s35, 0
      %p118 = por %p116, %p117
      %p119 = scmp.ne.s32.totalorder %s108, %s111
      %p120 = scmp.eq.s32.totalorder %s40, 1
      %p121 = por %p119, %p120
      %p122 = scmp.ne.s32.totalorder %s111, %s112
      %p123 = scmp.eq.s32.totalorder %s40, 0
      %p124 = por %p122, %p123
      %p125 = scmp.ne.s32.totalorder %s111, %s112
      %p126 = scmp.eq.s32.totalorder %s41, 1
      %p127 = por %p125, %p126
      %p129 = scmp.ne.s32.totalorder %s112, %s128
      %p130 = scmp.eq.s32.totalorder %s41, 0
      %p131 = por %p129, %p130
      %s132 = ssub.s32 %s42, %s54
      %s133 = ssub.s32 %s43, %s50
      %s134 = sor.u32 %s132, %s133
      %p135 = scmp.eq.s32.totalorder %s134, 0
      %s137 = sadd.s32 %s136, 1
      %s138 = scalar_select %p135, %s136, %s137
      %p141 = pneg %p135
      %p142 = scmp.eq.s32.totalorder %s35, 1
      %p143 = por %p141, %p142
      %p144 = scmp.ne.s32.totalorder %s136, %s139
      %p145 = scmp.eq.s32.totalorder %s35, 0
      %p146 = por %p144, %p145
      %p147 = scmp.ne.s32.totalorder %s136, %s139
      %p148 = scmp.eq.s32.totalorder %s40, 1
      %p149 = por %p147, %p148
      %p150 = scmp.ne.s32.totalorder %s139, %s140
      %p151 = scmp.eq.s32.totalorder %s40, 0
      %p152 = por %p150, %p151
      %p153 = scmp.ne.s32.totalorder %s139, %s140
      %p154 = scmp.eq.s32.totalorder %s41, 1
      %p155 = por %p153, %p154
      %p157 = scmp.ne.s32.totalorder %s140, %s156
      %p158 = scmp.eq.s32.totalorder %s41, 0
      %p159 = por %p157, %p158
      %s160 = ssub.s32 %s42, %s54
      %s161 = ssub.s32 %s43, %s50
      %s162 = sor.u32 %s160, %s161
      %p163 = scmp.eq.s32.totalorder %s162, 0
      %s165 = sadd.s32 %s164, 1
      %s166 = scalar_select %p163, %s164, %s165
      %p169 = pneg %p163
      %p170 = scmp.eq.s32.totalorder %s35, 1
      %p171 = por %p169, %p170
      %p172 = scmp.ne.s32.totalorder %s164, %s167
      %p173 = scmp.eq.s32.totalorder %s35, 0
      %p174 = por %p172, %p173
      %p175 = scmp.ne.s32.totalorder %s164, %s167
      %p176 = scmp.eq.s32.totalorder %s40, 1
      %p177 = por %p175, %p176
      %p178 = scmp.ne.s32.totalorder %s167, %s168
      %p179 = scmp.eq.s32.totalorder %s40, 0
      %p180 = por %p178, %p179
      %p181 = scmp.ne.s32.totalorder %s167, %s168
      %p182 = scmp.eq.s32.totalorder %s41, 1
      %p183 = por %p181, %p182
      %p185 = scmp.ne.s32.totalorder %s168, %s184
      %p186 = scmp.eq.s32.totalorder %s41, 0
      %p187 = por %p185, %p186
      %s188 = ssub.s32 %s42, %s54
      %s189 = ssub.s32 %s43, %s50
      %s190 = sor.u32 %s188, %s189
      %p191 = scmp.eq.s32.totalorder %s190, 0
      %s193 = sadd.s32 %s192, 1
      %s194 = scalar_select %p191, %s192, %s193
      %p197 = pneg %p191
      %p198 = scmp.eq.s32.totalorder %s35, 1
      %p199 = por %p197, %p198
      %p200 = scmp.ne.s32.totalorder %s192, %s195
      %p201 = scmp.eq.s32.totalorder %s35, 0
      %p202 = por %p200, %p201
      %p203 = scmp.ne.s32.totalorder %s192, %s195
      %p204 = scmp.eq.s32.totalorder %s40, 1
      %p205 = por %p203, %p204
      %p206 = scmp.ne.s32.totalorder %s195, %s196
      %p207 = scmp.eq.s32.totalorder %s40, 0
      %p208 = por %p206, %p207
      %p209 = scmp.ne.s32.totalorder %s195, %s196
      %p210 = scmp.eq.s32.totalorder %s41, 1
      %p211 = por %p209, %p210
      %p213 = scmp.ne.s32.totalorder %s196, %s212
      %p214 = scmp.eq.s32.totalorder %s41, 0
      %p215 = por %p213, %p214
      %s216 = ssub.s32 %s42, %s54
      %s217 = ssub.s32 %s43, %s50
      %s218 = sor.u32 %s216, %s217
      %p219 = scmp.eq.s32.totalorder %s218, 0
      %s221 = sadd.s32 %s220, 1
      %s222 = scalar_select %p219, %s220, %s221
      %p225 = pneg %p219
      %p226 = scmp.eq.s32.totalorder %s35, 1
      %p227 = por %p225, %p226
      %p228 = scmp.ne.s32.totalorder %s220, %s223
      %p229 = scmp.eq.s32.totalorder %s35, 0
      %p230 = por %p228, %p229
      %p231 = scmp.ne.s32.totalorder %s220, %s223
      %p232 = scmp.eq.s32.totalorder %s40, 1
      %p233 = por %p231, %p232
      %p234 = scmp.ne.s32.totalorder %s223, %s224
      %p235 = scmp.eq.s32.totalorder %s40, 0
      %p236 = por %p234, %p235
      %p237 = scmp.ne.s32.totalorder %s223, %s224
      %p238 = scmp.eq.s32.totalorder %s41, 1
      %p239 = por %p237, %p238
      %p241 = scmp.ne.s32.totalorder %s224, %s240
      %p242 = scmp.eq.s32.totalorder %s41, 0
      %p243 = por %p241, %p242
      %s244 = ssub.s32 %s42, %s54
      %s245 = ssub.s32 %s43, %s50
      %s246 = sor.u32 %s244, %s245
      %p247 = scmp.eq.s32.totalorder %s246, 0
      %s249 = sadd.s32 %s248, 1
      %s250 = scalar_select %p247, %s248, %s249
      %p253 = pneg %p247
      %p254 = scmp.eq.s32.totalorder %s35, 1
      %p255 = por %p253, %p254
      %p256 = scmp.ne.s32.totalorder %s248, %s251
      %p257 = scmp.eq.s32.totalorder %s35, 0
      %p258 = por %p256, %p257
      %p259 = scmp.ne.s32.totalorder %s248, %s251
      %p260 = scmp.eq.s32.totalorder %s40, 1
      %p261 = por %p259, %p260
      %p262 = scmp.ne.s32.totalorder %s251, %s252
      %p263 = scmp.eq.s32.totalorder %s40, 0
      %p264 = por %p262, %p263
      %p265 = scmp.ne.s32.totalorder %s251, %s252
      %p266 = scmp.eq.s32.totalorder %s41, 1
      %p267 = por %p265, %p266
      %p269 = scmp.ne.s32.totalorder %s252, %s268
      %p270 = scmp.eq.s32.totalorder %s41, 0
      %p271 = por %p269, %p270
      %s272 = ssub.s32 %s42, %s54
      %s273 = ssub.s32 %s43, %s50
      %s274 = sor.u32 %s272, %s273
      %p275 = scmp.eq.s32.totalorder %s274, 0
      %s277 = sadd.s32 %s276, 1
      %s278 = scalar_select %p275, %s276, %s277
      %p281 = pneg %p275
      %p282 = scmp.eq.s32.totalorder %s35, 1
      %p283 = por %p281, %p282
      %p284 = scmp.ne.s32.totalorder %s276, %s279
      %p285 = scmp.eq.s32.totalorder %s35, 0
      %p286 = por %p284, %p285
      %p287 = scmp.ne.s32.totalorder %s276, %s279
      %p288 = scmp.eq.s32.totalorder %s40, 1
      %p289 = por %p287, %p288
      %p290 = scmp.ne.s32.totalorder %s279, %s280
      %p291 = scmp.eq.s32.totalorder %s40, 0
      %p292 = por %p290, %p291
      %p293 = scmp.ne.s32.totalorder %s279, %s280
      %p294 = scmp.eq.s32.totalorder %s41, 1
      %p295 = por %p293, %p294
      %p297 = scmp.ne.s32.totalorder %s280, %s296
      %p298 = scmp.eq.s32.totalorder %s41, 0
      %p299 = por %p297, %p298
      %s300 = ssub.s32 %s42, %s54
      %s301 = ssub.s32 %s43, %s50
      %s302 = sor.u32 %s300, %s301
      %p303 = scmp.eq.s32.totalorder %s302, 0
      %s305 = sadd.s32 %s304, 1
      %s306 = scalar_select %p303, %s304, %s305
      %p309 = pneg %p303
      %p310 = scmp.eq.s32.totalorder %s35, 1
      %p311 = por %p309, %p310
      %p312 = scmp.ne.s32.totalorder %s304, %s307
      %p313 = scmp.eq.s32.totalorder %s35, 0
      %p314 = por %p312, %p313
      %p315 = scmp.ne.s32.totalorder %s304, %s307
      %p316 = scmp.eq.s32.totalorder %s40, 1
      %p317 = por %p315, %p316
      %p318 = scmp.ne.s32.totalorder %s307, %s308
      %p319 = scmp.eq.s32.totalorder %s40, 0
      %p320 = por %p318, %p319
      %p321 = scmp.ne.s32.totalorder %s307, %s308
      %p322 = scmp.eq.s32.totalorder %s41, 1
      %p323 = por %p321, %p322
      %p325 = scmp.ne.s32.totalorder %s308, %s324
      %p326 = scmp.eq.s32.totalorder %s41, 0
      %p327 = por %p325, %p326
      %s328 = ssub.s32 %s42, %s54
      %p329 = scmp.eq.s32.totalorder %s328, 0
      %s331 = sadd.s32 %s330, 1
      %s332 = scalar_select %p329, %s330, %s331
      %p335 = pneg %p329
      %p336 = scmp.eq.s32.totalorder %s35, 1
      %p337 = por %p335, %p336
      %p338 = scmp.ne.s32.totalorder %s330, %s333
      %p339 = scmp.eq.s32.totalorder %s35, 0
      %p340 = por %p338, %p339
      %p341 = scmp.ne.s32.totalorder %s330, %s333
      %p342 = scmp.eq.s32.totalorder %s40, 1
      %p343 = por %p341, %p342
      %p344 = scmp.ne.s32.totalorder %s333, %s334
      %p345 = scmp.eq.s32.totalorder %s40, 0
      %p346 = por %p344, %p345
      %p347 = scmp.ne.s32.totalorder %s333, %s334
      %p348 = scmp.eq.s32.totalorder %s41, 1
      %p349 = por %p347, %p348
      %p351 = scmp.ne.s32.totalorder %s334, %s350
      %p352 = scmp.eq.s32.totalorder %s41, 0
      %p353 = por %p351, %p352
      %p354 = scmp.le.s32.totalorder 1, %s35
      %p355 = scmp.lt.s32.totalorder %s35, 3
      %p356 = pnand %p354, %p355
      %p357 = pneg %p356
      // Predicated region
      $region9: #{tpu_custom_call.1} parent=5 // pred_check
        _
      $region10: #{tpu_custom_call.1} parent=5 // pred_check_branch
        %359 = sbr.rel (%p356) target = $region12
      $region11: #{tpu_custom_call.1} parent=5 // pred_region
        %s360 = ssub.s32 %s35, 1
        // Predicated region
        $region13: #{tpu_custom_call.1} parent=11 // pred_check
          %p361 = pneg %p68
        $region14: #{tpu_custom_call.1} parent=11 // pred_check_branch
          %363 = sbr.rel (%p361) target = $region16
        $region15: #{tpu_custom_call.1} parent=11 // pred_region
          _
        $region16: #{tpu_custom_call.1} parent=11 // pred_fallthru
          _
      $region12: #{tpu_custom_call.1} parent=5 // pred_fallthru
        _
      %p364 = scmp.lt.s32.totalorder %s35, 2
      // Predicated region
      $region17: #{tpu_custom_call.1} parent=5 // pred_check
        %p365 = pneg %p364
      $region18: #{tpu_custom_call.1} parent=5 // pred_check_branch
        %367 = sbr.rel (%p365) target = $region20
      $region19: #{tpu_custom_call.1} parent=5 // pred_region
        // Predicated region
        $region21: #{tpu_custom_call.1} parent=19 // pred_check
          %p368 = pneg %p90
        $region22: #{tpu_custom_call.1} parent=19 // pred_check_branch
          %370 = sbr.rel (%p368) target = $region24
        $region23: #{tpu_custom_call.1} parent=19 // pred_region
          %s371 = sand.u32 %s80, 1
          %s372 = scalar_lea.sflag [#allocation5], %s371
          %s373 = sand.u32 %s80, 1
          %s374 = smul.addr %s373, 16
          %s375 = scalar_lea.vmem [#allocation4], %s374
          %s376 = smul.u32 2, %s43
          %s378 = ssub.s32 256, 256
          %379 = vsyncadd %s372, %s378
          %s380 = smul.addr %s42, 2
          %s381 = sadd.s32 %s376, %s380
          %s382 = smul.addr %s381, 128
          %s383 = scalar_lea.hbm %s1, %s382
          %s384 = sshll.u32 %s375, 4
          %s385 = int_to_ptr.vmem [resolvable:$true] %s384
          %390 = dma.hbm_to_vmem [thread:$0]  %s383, 256, %s385, %s372, 128, 128, 8
        $region24: #{tpu_custom_call.1} parent=19 // pred_fallthru
          _
        // Predicated region
        $region25: #{tpu_custom_call.1} parent=19 // pred_check
          %p391 = pneg %p118
        $region26: #{tpu_custom_call.1} parent=19 // pred_check_branch
          %393 = sbr.rel (%p391) target = $region28
        $region27: #{tpu_custom_call.1} parent=19 // pred_region
          %s394 = sand.u32 %s35, 1
          %s395 = scalar_lea.sflag [#allocation8], %s394
          %s396 = sand.u32 %s108, 1
          %s397 = smul.addr %s396, 16
          %s398 = scalar_lea.vmem [#allocation7], %s397
          %s399 = smul.u32 2, %s43
          %s401 = ssub.s32 256, 256
          %402 = vsyncadd %s395, %s401
          %s403 = smul.addr %s42, 2
          %s404 = sadd.s32 %s399, %s403
          %s405 = smul.addr %s404, 128
          %s406 = scalar_lea.hbm %s2, %s405
          %s407 = sshll.u32 %s398, 4
          %s408 = int_to_ptr.vmem [resolvable:$true] %s407
          %413 = dma.hbm_to_vmem [thread:$0]  %s406, 256, %s408, %s395, 128, 128, 8
        $region28: #{tpu_custom_call.1} parent=19 // pred_fallthru
          _
        // Predicated region
        $region29: #{tpu_custom_call.1} parent=19 // pred_check
          %p414 = pneg %p146
        $region30: #{tpu_custom_call.1} parent=19 // pred_check_branch
          %416 = sbr.rel (%p414) target = $region32
        $region31: #{tpu_custom_call.1} parent=19 // pred_region
          %s417 = sand.u32 %s35, 1
          %s418 = scalar_lea.sflag [#allocation8], %s417
          %s419 = sand.u32 %s136, 1
          %s420 = smul.addr %s419, 16
          %s421 = scalar_lea.vmem [#allocation9], %s420
          %s422 = smul.u32 2, %s43
          %s424 = ssub.s32 256, 256
          %425 = vsyncadd %s418, %s424
          %s426 = smul.addr %s42, 2
          %s427 = sadd.s32 %s422, %s426
          %s428 = smul.addr %s427, 128
          %s429 = scalar_lea.hbm %s3, %s428
          %s430 = sshll.u32 %s421, 4
          %s431 = int_to_ptr.vmem [resolvable:$true] %s430
          %436 = dma.hbm_to_vmem [thread:$0]  %s429, 256, %s431, %s418, 128, 128, 8
        $region32: #{tpu_custom_call.1} parent=19 // pred_fallthru
          _
        // Predicated region
        $region33: #{tpu_custom_call.1} parent=19 // pred_check
          %p437 = pneg %p174
        $region34: #{tpu_custom_call.1} parent=19 // pred_check_branch
          %439 = sbr.rel (%p437) target = $region36
        $region35: #{tpu_custom_call.1} parent=19 // pred_region
          %s440 = sand.u32 %s35, 1
          %s441 = scalar_lea.sflag [#allocation11], %s440
          %s442 = sand.u32 %s164, 1
          %s443 = smul.addr %s442, 16
          %s444 = scalar_lea.vmem [#allocation10], %s443
          %s445 = smul.u32 2, %s43
          %s447 = ssub.s32 256, 256
          %448 = vsyncadd %s441, %s447
          %s449 = smul.addr %s42, 2
          %s450 = sadd.s32 %s445, %s449
          %s451 = smul.addr %s450, 128
          %s452 = scalar_lea.hbm %s4, %s451
          %s453 = sshll.u32 %s444, 4
          %s454 = int_to_ptr.vmem [resolvable:$true] %s453
          %459 = dma.hbm_to_vmem [thread:$0]  %s452, 256, %s454, %s441, 128, 128, 8
        $region36: #{tpu_custom_call.1} parent=19 // pred_fallthru
          _
        // Predicated region
        $region37: #{tpu_custom_call.1} parent=19 // pred_check
          %p460 = pneg %p202
        $region38: #{tpu_custom_call.1} parent=19 // pred_check_branch
          %462 = sbr.rel (%p460) target = $region40
        $region39: #{tpu_custom_call.1} parent=19 // pred_region
          %s463 = sand.u32 %s35, 1
          %s464 = scalar_lea.sflag [#allocation11], %s463
          %s465 = sand.u32 %s192, 1
          %s466 = smul.addr %s465, 16
          %s467 = scalar_lea.vmem [#allocation12], %s466
          %s468 = smul.u32 2, %s43
          %s470 = ssub.s32 256, 256
          %471 = vsyncadd %s464, %s470
          %s472 = smul.addr %s42, 2
          %s473 = sadd.s32 %s468, %s472
          %s474 = smul.addr %s473, 128
          %s475 = scalar_lea.hbm %s5, %s474
          %s476 = sshll.u32 %s467, 4
          %s477 = int_to_ptr.vmem [resolvable:$true] %s476
          %482 = dma.hbm_to_vmem [thread:$0]  %s475, 256, %s477, %s464, 128, 128, 8
        $region40: #{tpu_custom_call.1} parent=19 // pred_fallthru
          _
        // Predicated region
        $region41: #{tpu_custom_call.1} parent=19 // pred_check
          %p483 = pneg %p230
        $region42: #{tpu_custom_call.1} parent=19 // pred_check_branch
          %485 = sbr.rel (%p483) target = $region44
        $region43: #{tpu_custom_call.1} parent=19 // pred_region
          %s486 = sand.u32 %s35, 1
          %s487 = scalar_lea.sflag [#allocation14], %s486
          %s488 = sand.u32 %s220, 1
          %s489 = smul.addr %s488, 32
          %s490 = scalar_lea.vmem [#allocation13], %s489
          %s491 = smul.u32 2, %s43
          %s493 = ssub.s32 512, 512
          %494 = vsyncadd %s487, %s493
          %s495 = smul.addr %s42, 4
          %s496 = sadd.s32 %s491, %s495
          %s497 = smul.addr %s496, 128
          %s498 = scalar_lea.hbm %s6, %s497
          %s499 = sshll.u32 %s490, 4
          %s500 = int_to_ptr.vmem [resolvable:$true] %s499
          %505 = dma.hbm_to_vmem [thread:$0]  %s498, 512, %s500, %s487, 128, 128, 8
        $region44: #{tpu_custom_call.1} parent=19 // pred_fallthru
          _
        // Predicated region
        $region45: #{tpu_custom_call.1} parent=19 // pred_check
          %p506 = pneg %p258
        $region46: #{tpu_custom_call.1} parent=19 // pred_check_branch
          %508 = sbr.rel (%p506) target = $region48
        $region47: #{tpu_custom_call.1} parent=19 // pred_region
          %s509 = sand.u32 %s35, 1
          %s510 = scalar_lea.sflag [#allocation14], %s509
          %s511 = sand.u32 %s248, 1
          %s512 = smul.addr %s511, 32
          %s513 = scalar_lea.vmem [#allocation15], %s512
          %s514 = smul.u32 2, %s43
          %s516 = ssub.s32 512, 512
          %517 = vsyncadd %s510, %s516
          %s518 = smul.addr %s42, 4
          %s519 = sadd.s32 %s514, %s518
          %s520 = smul.addr %s519, 128
          %s521 = scalar_lea.hbm %s7, %s520
          %s522 = sshll.u32 %s513, 4
          %s523 = int_to_ptr.vmem [resolvable:$true] %s522
          %528 = dma.hbm_to_vmem [thread:$0]  %s521, 512, %s523, %s510, 128, 128, 8
        $region48: #{tpu_custom_call.1} parent=19 // pred_fallthru
          _
        // Predicated region
        $region49: #{tpu_custom_call.1} parent=19 // pred_check
          %p529 = pneg %p286
        $region50: #{tpu_custom_call.1} parent=19 // pred_check_branch
          %531 = sbr.rel (%p529) target = $region52
        $region51: #{tpu_custom_call.1} parent=19 // pred_region
          %s532 = sand.u32 %s35, 1
          %s533 = scalar_lea.sflag [#allocation17], %s532
          %s534 = sand.u32 %s276, 1
          %s535 = smul.addr %s534, 32
          %s536 = scalar_lea.vmem [#allocation16], %s535
          %s537 = smul.u32 2, %s43
          %s539 = ssub.s32 512, 512
          %540 = vsyncadd %s533, %s539
          %s541 = smul.addr %s42, 4
          %s542 = sadd.s32 %s537, %s541
          %s543 = smul.addr %s542, 128
          %s544 = scalar_lea.hbm %s8, %s543
          %s545 = sshll.u32 %s536, 4
          %s546 = int_to_ptr.vmem [resolvable:$true] %s545
          %551 = dma.hbm_to_vmem [thread:$0]  %s544, 512, %s546, %s533, 128, 128, 8
        $region52: #{tpu_custom_call.1} parent=19 // pred_fallthru
          _
        // Predicated region
        $region53: #{tpu_custom_call.1} parent=19 // pred_check
          %p552 = pneg %p314
        $region54: #{tpu_custom_call.1} parent=19 // pred_check_branch
          %554 = sbr.rel (%p552) target = $region56
        $region55: #{tpu_custom_call.1} parent=19 // pred_region
          %s555 = sand.u32 %s35, 1
          %s556 = scalar_lea.sflag [#allocation17], %s555
          %s557 = sand.u32 %s304, 1
          %s558 = smul.addr %s557, 32
          %s559 = scalar_lea.vmem [#allocation18], %s558
          %s560 = smul.u32 2, %s43
          %s562 = ssub.s32 512, 512
          %563 = vsyncadd %s556, %s562
          %s564 = smul.addr %s42, 4
          %s565 = sadd.s32 %s560, %s564
          %s566 = smul.addr %s565, 128
          %s567 = scalar_lea.hbm %s9, %s566
          %s568 = sshll.u32 %s559, 4
          %s569 = int_to_ptr.vmem [resolvable:$true] %s568
          %574 = dma.hbm_to_vmem [thread:$0]  %s567, 512, %s569, %s556, 128, 128, 8
        $region56: #{tpu_custom_call.1} parent=19 // pred_fallthru
          _
      $region20: #{tpu_custom_call.1} parent=5 // pred_fallthru
        _
      %p575 = scmp.le.s32.totalorder 1, %s35
      %p576 = scmp.lt.s32.totalorder %s35, 3
      %p577 = pnand %p575, %p576
      %p578 = pneg %p577
      // Predicated region
      $region57: #{tpu_custom_call.1} parent=5 // pred_check
        _
      $region58: #{tpu_custom_call.1} parent=5 // pred_check_branch
        %580 = sbr.rel (%p577) target = $region60
      $region59: #{tpu_custom_call.1} parent=5 // pred_region
        %s581 = ssub.s32 %s35, 1
        %s582 = sand.u32 %s83, 1
        %s583 = scalar_lea.sflag [#allocation5], %s582
        %s584 = sand.u32 %s83, 1
        %s585 = smul.addr %s584, 16
        %s586 = scalar_lea.vmem [#allocation4], %s585
        // Predicated region
        $region61: #{tpu_custom_call.1} parent=59 // pred_check
          %p587 = pneg %p96
        $region62: #{tpu_custom_call.1} parent=59 // pred_check_branch
          %589 = sbr.rel (%p587) target = $region64
        $region63: #{tpu_custom_call.1} parent=59 // pred_region
          %590 = dma.done %s583, 256
        $region64: #{tpu_custom_call.1} parent=59 // pred_fallthru
          _
        %s591 = sand.u32 %s40, 1
        %s592 = scalar_lea.sflag [#allocation8], %s591
        %s593 = sand.u32 %s111, 1
        %s594 = smul.addr %s593, 16
        %s595 = scalar_lea.vmem [#allocation7], %s594
        // Predicated region
        $region65: #{tpu_custom_call.1} parent=59 // pred_check
          %p596 = pneg %p124
        $region66: #{tpu_custom_call.1} parent=59 // pred_check_branch
          %598 = sbr.rel (%p596) target = $region68
        $region67: #{tpu_custom_call.1} parent=59 // pred_region
          %599 = dma.done %s592, 256
        $region68: #{tpu_custom_call.1} parent=59 // pred_fallthru
          _
        %s600 = sand.u32 %s40, 1
        %s601 = scalar_lea.sflag [#allocation8], %s600
        %s602 = sand.u32 %s139, 1
        %s603 = smul.addr %s602, 16
        %s604 = scalar_lea.vmem [#allocation9], %s603
        // Predicated region
        $region69: #{tpu_custom_call.1} parent=59 // pred_check
          %p605 = pneg %p152
        $region70: #{tpu_custom_call.1} parent=59 // pred_check_branch
          %607 = sbr.rel (%p605) target = $region72
        $region71: #{tpu_custom_call.1} parent=59 // pred_region
          %608 = dma.done %s601, 256
        $region72: #{tpu_custom_call.1} parent=59 // pred_fallthru
          _
        %s609 = sand.u32 %s40, 1
        %s610 = scalar_lea.sflag [#allocation11], %s609
        %s611 = sand.u32 %s167, 1
        %s612 = smul.addr %s611, 16
        %s613 = scalar_lea.vmem [#allocation10], %s612
        // Predicated region
        $region73: #{tpu_custom_call.1} parent=59 // pred_check
          %p614 = pneg %p180
        $region74: #{tpu_custom_call.1} parent=59 // pred_check_branch
          %616 = sbr.rel (%p614) target = $region76
        $region75: #{tpu_custom_call.1} parent=59 // pred_region
          %617 = dma.done %s610, 256
        $region76: #{tpu_custom_call.1} parent=59 // pred_fallthru
          _
        %s618 = sand.u32 %s40, 1
        %s619 = scalar_lea.sflag [#allocation11], %s618
        %s620 = sand.u32 %s195, 1
        %s621 = smul.addr %s620, 16
        %s622 = scalar_lea.vmem [#allocation12], %s621
        // Predicated region
        $region77: #{tpu_custom_call.1} parent=59 // pred_check
          %p623 = pneg %p208
        $region78: #{tpu_custom_call.1} parent=59 // pred_check_branch
          %625 = sbr.rel (%p623) target = $region80
        $region79: #{tpu_custom_call.1} parent=59 // pred_region
          %626 = dma.done %s619, 256
        $region80: #{tpu_custom_call.1} parent=59 // pred_fallthru
          _
        %s627 = sand.u32 %s40, 1
        %s628 = scalar_lea.sflag [#allocation14], %s627
        %s629 = sand.u32 %s223, 1
        %s630 = smul.addr %s629, 32
        %s631 = scalar_lea.vmem [#allocation13], %s630
        // Predicated region
        $region81: #{tpu_custom_call.1} parent=59 // pred_check
          %p632 = pneg %p236
        $region82: #{tpu_custom_call.1} parent=59 // pred_check_branch
          %634 = sbr.rel (%p632) target = $region84
        $region83: #{tpu_custom_call.1} parent=59 // pred_region
          %635 = dma.done %s628, 512
        $region84: #{tpu_custom_call.1} parent=59 // pred_fallthru
          _
        %s636 = sand.u32 %s40, 1
        %s637 = scalar_lea.sflag [#allocation14], %s636
        %s638 = sand.u32 %s251, 1
        %s639 = smul.addr %s638, 32
        %s640 = scalar_lea.vmem [#allocation15], %s639
        // Predicated region
        $region85: #{tpu_custom_call.1} parent=59 // pred_check
          %p641 = pneg %p264
        $region86: #{tpu_custom_call.1} parent=59 // pred_check_branch
          %643 = sbr.rel (%p641) target = $region88
        $region87: #{tpu_custom_call.1} parent=59 // pred_region
          %644 = dma.done %s637, 512
        $region88: #{tpu_custom_call.1} parent=59 // pred_fallthru
          _
        %s645 = sand.u32 %s40, 1
        %s646 = scalar_lea.sflag [#allocation17], %s645
        %s647 = sand.u32 %s279, 1
        %s648 = smul.addr %s647, 32
        %s649 = scalar_lea.vmem [#allocation16], %s648
        // Predicated region
        $region89: #{tpu_custom_call.1} parent=59 // pred_check
          %p650 = pneg %p292
        $region90: #{tpu_custom_call.1} parent=59 // pred_check_branch
          %652 = sbr.rel (%p650) target = $region92
        $region91: #{tpu_custom_call.1} parent=59 // pred_region
          %653 = dma.done %s646, 512
        $region92: #{tpu_custom_call.1} parent=59 // pred_fallthru
          _
        %s654 = sand.u32 %s40, 1
        %s655 = scalar_lea.sflag [#allocation17], %s654
        %s656 = sand.u32 %s307, 1
        %s657 = smul.addr %s656, 32
        %s658 = scalar_lea.vmem [#allocation18], %s657
        // Predicated region
        $region93: #{tpu_custom_call.1} parent=59 // pred_check
          %p659 = pneg %p320
        $region94: #{tpu_custom_call.1} parent=59 // pred_check_branch
          %661 = sbr.rel (%p659) target = $region96
        $region95: #{tpu_custom_call.1} parent=59 // pred_region
          %662 = dma.done %s655, 512
        $region96: #{tpu_custom_call.1} parent=59 // pred_fallthru
          _
        %p663 = pneg %p68
        %p664 = pneg %p65
        %s665 = sand.u32 %s83, 1
        %s666 = scalar_lea.sflag [#allocation5], %s665
        %s667 = sand.u32 %s83, 1
        %s668 = smul.addr %s667, 16
        %s669 = scalar_lea.vmem [#allocation4], %s668
        %p670 = pneg %p96
        %p671 = pneg %p93
        %s672 = sand.u32 %s40, 1
        %s673 = scalar_lea.sflag [#allocation8], %s672
        %s674 = sand.u32 %s111, 1
        %s675 = smul.addr %s674, 16
        %s676 = scalar_lea.vmem [#allocation7], %s675
        %p677 = pneg %p124
        %p678 = pneg %p121
        %s679 = sand.u32 %s40, 1
        %s680 = scalar_lea.sflag [#allocation8], %s679
        %s681 = sand.u32 %s139, 1
        %s682 = smul.addr %s681, 16
        %s683 = scalar_lea.vmem [#allocation9], %s682
        %p684 = pneg %p152
        %p685 = pneg %p149
        %s686 = sand.u32 %s40, 1
        %s687 = scalar_lea.sflag [#allocation11], %s686
        %s688 = sand.u32 %s167, 1
        %s689 = smul.addr %s688, 16
        %s690 = scalar_lea.vmem [#allocation10], %s689
        %p691 = pneg %p180
        %p692 = pneg %p177
        %s693 = sand.u32 %s40, 1
        %s694 = scalar_lea.sflag [#allocation11], %s693
        %s695 = sand.u32 %s195, 1
        %s696 = smul.addr %s695, 16
        %s697 = scalar_lea.vmem [#allocation12], %s696
        %p698 = pneg %p208
        %p699 = pneg %p205
        %s700 = sand.u32 %s40, 1
        %s701 = scalar_lea.sflag [#allocation14], %s700
        %s702 = sand.u32 %s223, 1
        %s703 = smul.addr %s702, 32
        %s704 = scalar_lea.vmem [#allocation13], %s703
        %p705 = pneg %p236
        %p706 = pneg %p233
        %s707 = sand.u32 %s40, 1
        %s708 = scalar_lea.sflag [#allocation14], %s707
        %s709 = sand.u32 %s251, 1
        %s710 = smul.addr %s709, 32
        %s711 = scalar_lea.vmem [#allocation15], %s710
        %p712 = pneg %p264
        %p713 = pneg %p261
        %s714 = sand.u32 %s40, 1
        %s715 = scalar_lea.sflag [#allocation17], %s714
        %s716 = sand.u32 %s279, 1
        %s717 = smul.addr %s716, 32
        %s718 = scalar_lea.vmem [#allocation16], %s717
        %p719 = pneg %p292
        %p720 = pneg %p289
        %s721 = sand.u32 %s40, 1
        %s722 = scalar_lea.sflag [#allocation17], %s721
        %s723 = sand.u32 %s307, 1
        %s724 = smul.addr %s723, 32
        %s725 = scalar_lea.vmem [#allocation18], %s724
        %p726 = pneg %p320
        %p727 = pneg %p317
        %p728 = pneg %p346
        %p729 = pneg %p343
        %s730 = sand.u32 %s333, 1
        %s731 = scalar_lea.sflag [#allocation6], %s730
        %s732 = sand.u32 %s333, 1
        %s733 = smul.addr %s732, 8
        %s734 = scalar_lea.vmem [#allocation19], %s733
        %s735 = smul.u32 2, %s45
        %s736 = smul.u32 2, %s45
        %s737 = smul.u32 2, %s45
        %s738 = smul.u32 2, %s45
        %s739 = smul.u32 2, %s45
        %s740 = smul.u32 2, %s45
        %s741 = smul.u32 2, %s45
        %s742 = smul.u32 2, %s45
        %s743 = smul.u32 2, %s45
        %p744 = scmp.eq.s32.totalorder %s45, 0
        // Predicated region
        $region97: #{tpu_custom_call.1} parent=59 // pred_check
          %p745 = pneg %p744
        $region98: #{tpu_custom_call.1} parent=59 // pred_check_branch
          %747 = sbr.rel (%p745) target = $region100
        $region99: #{tpu_custom_call.1} parent=59 // pred_region
          %vm748 = vcmask 130048
          %749 = vst.msk [vmem:[#allocation2] sm:$0xff] %vm748, 0.0
          %750 = vst.msk [vmem:[#allocation2 + $0x8] sm:$0xff] %vm748, 0.0
          %751 = vst.msk [vmem:[#allocation2 + $0x10] sm:$0xff] %vm748, 0.0
          %752 = vst.msk [vmem:[#allocation2 + $0x18] sm:$0xff] %vm748, 0.0
          %753 = vst.msk [vmem:[#allocation2 + $0x20] sm:$0xff] %vm748, 0.0
          %754 = vst.msk [vmem:[#allocation2 + $0x28] sm:$0xff] %vm748, 0.0
          %755 = vst.msk [vmem:[#allocation2 + $0x30] sm:$0xff] %vm748, 0.0
          %756 = vst.msk [vmem:[#allocation2 + $0x38] sm:$0xff] %vm748, 0.0
          %757 = vst.msk [vmem:[#allocation2 + $0x40] sm:$0xff] %vm748, 0.0
          %758 = vst.msk [vmem:[#allocation2 + $0x48] sm:$0xff] %vm748, 0.0
          %759 = vst.msk [vmem:[#allocation2 + $0x50] sm:$0xff] %vm748, 0.0
          %760 = vst.msk [vmem:[#allocation2 + $0x58] sm:$0xff] %vm748, 0.0
          %761 = vst.msk [vmem:[#allocation2 + $0x60] sm:$0xff] %vm748, 0.0
          %762 = vst.msk [vmem:[#allocation2 + $0x68] sm:$0xff] %vm748, 0.0
        $region100: #{tpu_custom_call.1} parent=59 // pred_fallthru
          _
        %v763 = vld [vmem:[%s586] sm:$0xff]
        %v764 = vld [vmem:[%s586 + $0x8] sm:$0xff]
        %vm765 = vcmp.ne.f32.partialorder %v763, 0.0
        %vm766 = vcmp.ne.f32.partialorder %v764, 0.0
        %v767 = vsel %vm765, 1, 0
        %v768 = vsel %vm766, 1, 0
        %v769 = vcvt.s32.f32 %v767
        %v770 = vcvt.s32.f32 %v768
        %v771 = vld [vmem:[%s595] sm:$0xff]
        %v772 = vld [vmem:[%s595 + $0x8] sm:$0xff]
        %v773 = vld [vmem:[%s631] sm:$0xff]
        %v774 = vld [vmem:[%s631 + $0x8] sm:$0xff]
        %v775 = vld [vmem:[%s640] sm:$0xff]
        %v776 = vld [vmem:[%s640 + $0x8] sm:$0xff]
        %v777 = vsub.f32 %v773, %v775
        %v778 = vsub.f32 %v774, %v776
        %s779 = scalar_lea.vmem %s631, 16 [#allocation13]
        %v780 = vld [vmem:[%s779] sm:$0xff]
        %v781 = vld [vmem:[%s779 + $0x8] sm:$0xff]
        %s782 = scalar_lea.vmem %s640, 16 [#allocation15]
        %v783 = vld [vmem:[%s782] sm:$0xff]
        %v784 = vld [vmem:[%s782 + $0x8] sm:$0xff]
        %v785 = vsub.f32 %v780, %v783
        %v786 = vsub.f32 %v781, %v784
        %v787 = vand.u32 2147483647, %v777
        %v788 = vand.u32 2147483647, %v778
        %vm789 = vcmp.lt.f32.partialorder %v787, 1.0
        %vm790 = vcmp.lt.f32.partialorder %v788, 1.0
        %v791 = vmul.f32 %v777, 0.5
        %v792 = vmul.f32 %v778, 0.5
        %v793 = vmul.f32 %v791, %v777
        %v794 = vmul.f32 %v792, %v778
        %v795 = vsub.f32 %v787, 0.5
        %v796 = vsub.f32 %v788, 0.5
        %v797 = vsel %vm789, %v793, %v795
        %v798 = vsel %vm790, %v794, %v796
        %v799 = vand.u32 2147483647, %v785
        %v800 = vand.u32 2147483647, %v786
        %vm801 = vcmp.lt.f32.partialorder %v799, 1.0
        %vm802 = vcmp.lt.f32.partialorder %v800, 1.0
        %v803 = vmul.f32 %v785, 0.5
        %v804 = vmul.f32 %v786, 0.5
        %v805 = vmul.f32 %v803, %v785
        %v806 = vmul.f32 %v804, %v786
        %v807 = vsub.f32 %v799, 0.5
        %v808 = vsub.f32 %v800, 0.5
        %v809 = vsel %vm801, %v805, %v807
        %v810 = vsel %vm802, %v806, %v808
        %v811 = vadd.f32 %v797, %v809
        %v812 = vadd.f32 %v798, %v810
        %v813 = vmul.f32 %v811, %v769
        %v814 = vmul.f32 %v812, %v770
        %s815 = sld [smem:[#allocation3]]
        %v816 = vld [vmem:[%s649] sm:$0xff]
        %v817 = vld [vmem:[%s649 + $0x8] sm:$0xff]
        %v818 = vld [vmem:[%s658] sm:$0xff]
        %v819 = vld [vmem:[%s658 + $0x8] sm:$0xff]
        %v820 = vsub.f32 %v816, %v818
        %v821 = vsub.f32 %v817, %v819
        %v822 = vand.u32 2147483647, %v820
        %v823 = vand.u32 2147483647, %v821
        %v824 = vstv %s815
        %v825 = vmul.f32 %v822, %v824
        %v826 = vmul.f32 %v823, %v824
        %s827 = scalar_lea.vmem %s649, 16 [#allocation16]
        %v828 = vld [vmem:[%s827] sm:$0xff]
        %v829 = vld [vmem:[%s827 + $0x8] sm:$0xff]
        %s830 = scalar_lea.vmem %s658, 16 [#allocation18]
        %v831 = vld [vmem:[%s830] sm:$0xff]
        %v832 = vld [vmem:[%s830 + $0x8] sm:$0xff]
        %v833 = vsub.f32 %v828, %v831
        %v834 = vsub.f32 %v829, %v832
        %v835 = vand.u32 2147483647, %v833
        %v836 = vand.u32 2147483647, %v834
        %v837 = vadd.f32 %v825, %v835
        %v838 = vadd.f32 %v826, %v836
        %v839 = vmul.f32 %v837, %v769
        %v840 = vmul.f32 %v838, %v770
        %v841 = vld [vmem:[%s613] sm:$0xff]
        %v842 = vld [vmem:[%s613 + $0x8] sm:$0xff]
        %v843 = vmul.f32 %v841, 0.5
        %v844 = vmul.f32 %v842, 0.5
        %v845 = vtanh.pop %v843
        %v846 = vtanh.pop %v844
        %v847 = vadd.f32 %v845, 1.0
        %v848 = vadd.f32 %v846, 1.0
        %v849 = vmul.f32 %v847, 0.5
        %v850 = vmul.f32 %v848, 0.5
        %v851 = vld [vmem:[%s622] sm:$0xff]
        %v852 = vld [vmem:[%s622 + $0x8] sm:$0xff]
        %v853 = vmul.f32 %v849, %v851
        %v854 = vmul.f32 %v850, %v852
        %v855 = vsub.f32 %v849, %v853
        %v856 = vsub.f32 %v850, %v854
        %v857 = vsub.f32 0.0, %v849
        %v858 = vsub.f32 0.0, %v850
        %v859 = vmul.f32 %v857, 1.442695
        %v860 = vpow.pop %v859
        %v861 = vmul.f32 %v858, 1.442695
        %v862 = vpow.pop %v861
        %v863 = vadd.f32 %v860, 1.0
        %v864 = vadd.f32 %v862, 1.0
        %v865 = vlog2.pop %v863
        %v866 = vmul.f32 %v865, 0.6931472
        %v867 = vlog2.pop %v864
        %v868 = vmul.f32 %v867, 0.6931472
        %v869 = vadd.f32 %v855, %v866
        %v870 = vadd.f32 %v856, %v868
        %v871 = vmul.f32 %v869, %v769
        %v872 = vmul.f32 %v870, %v770
        %v873 = vld [vmem:[%s604] sm:$0xff]
        %v874 = vld [vmem:[%s604 + $0x8] sm:$0xff]
        %v875 = vmul.f32 %v873, 0.5
        %v876 = vmul.f32 %v874, 0.5
        %v877 = vtanh.pop %v875
        %v878 = vtanh.pop %v876
        %v879 = vadd.f32 %v877, 1.0
        %v880 = vadd.f32 %v878, 1.0
        %v881 = vmul.f32 %v879, 0.5
        %v882 = vmul.f32 %v880, 0.5
        %v883 = vmul.f32 %v881, %v763
        %v884 = vmul.f32 %v882, %v764
        %v885 = vmul.f32 %v883, %v771
        %v886 = vmul.f32 %v884, %v772
        %v887 = vmul.f32 %v881, %v771
        %v888 = vmul.f32 %v882, %v772
        %v889 = vmul.f32 %v763, %v771
        %v890 = vmul.f32 %v764, %v772
        %v891 = vld [vmem:[#allocation2] sm:$0xff]
        %v892 = vld [vmem:[#allocation2 + $0x8] sm:$0xff]
        %v893 = vadd.f32 %v891, %v769
        %v894 = vadd.f32 %v892, %v770
        %vm895 = vcmask 130048
        %896 = vst.msk [vmem:[#allocation2] sm:$0xff] %vm895, %v893
        %897 = vst.msk [vmem:[#allocation2 + $0x8] sm:$0xff] %vm895, %v894
        %s898 = scalar_lea.vmem [#allocation2], 16
        %v899 = vld [vmem:[%s898] sm:$0xff]
        %v900 = vld [vmem:[%s898 + $0x8] sm:$0xff]
        %v901 = vadd.f32 %v899, %v813
        %v902 = vadd.f32 %v900, %v814
        %903 = vst.msk [vmem:[%s898] sm:$0xff] %vm895, %v901
        %904 = vst.msk [vmem:[%s898 + $0x8] sm:$0xff] %vm895, %v902
        %s905 = scalar_lea.vmem [#allocation2], 32
        %v906 = vld [vmem:[%s905] sm:$0xff]
        %v907 = vld [vmem:[%s905 + $0x8] sm:$0xff]
        %v908 = vadd.f32 %v906, %v839
        %v909 = vadd.f32 %v907, %v840
        %910 = vst.msk [vmem:[%s905] sm:$0xff] %vm895, %v908
        %911 = vst.msk [vmem:[%s905 + $0x8] sm:$0xff] %vm895, %v909
        %s912 = scalar_lea.vmem [#allocation2], 48
        %v913 = vld [vmem:[%s912] sm:$0xff]
        %v914 = vld [vmem:[%s912 + $0x8] sm:$0xff]
        %v915 = vadd.f32 %v913, %v871
        %v916 = vadd.f32 %v914, %v872
        %917 = vst.msk [vmem:[%s912] sm:$0xff] %vm895, %v915
        %918 = vst.msk [vmem:[%s912 + $0x8] sm:$0xff] %vm895, %v916
        %s919 = scalar_lea.vmem [#allocation2], 64
        %v920 = vld [vmem:[%s919] sm:$0xff]
        %v921 = vld [vmem:[%s919 + $0x8] sm:$0xff]
        %v922 = vadd.f32 %v920, %v885
        %v923 = vadd.f32 %v921, %v886
        %924 = vst.msk [vmem:[%s919] sm:$0xff] %vm895, %v922
        %925 = vst.msk [vmem:[%s919 + $0x8] sm:$0xff] %vm895, %v923
        %s926 = scalar_lea.vmem [#allocation2], 80
        %v927 = vld [vmem:[%s926] sm:$0xff]
        %v928 = vld [vmem:[%s926 + $0x8] sm:$0xff]
        %v929 = vadd.f32 %v927, %v887
        %v930 = vadd.f32 %v928, %v888
        %931 = vst.msk [vmem:[%s926] sm:$0xff] %vm895, %v929
        %932 = vst.msk [vmem:[%s926 + $0x8] sm:$0xff] %vm895, %v930
        %s933 = scalar_lea.vmem [#allocation2], 96
        %v934 = vld [vmem:[%s933] sm:$0xff]
        %v935 = vld [vmem:[%s933 + $0x8] sm:$0xff]
        %v936 = vadd.f32 %v934, %v889
        %v937 = vadd.f32 %v935, %v890
        %938 = vst.msk [vmem:[%s933] sm:$0xff] %vm895, %v936
        %939 = vst.msk [vmem:[%s933 + $0x8] sm:$0xff] %vm895, %v937
        // Predicated region
        $region101: #{tpu_custom_call.1} parent=59 // pred_check
          %p940 = pneg %p744
        $region102: #{tpu_custom_call.1} parent=59 // pred_check_branch
          %942 = sbr.rel (%p940) target = $region104
        $region103: #{tpu_custom_call.1} parent=59 // pred_region
          %v943 = vlaneseq
          %v944 = vshrl.u32 %v943, 7
          %v945 = vld [vmem:[#allocation2] sm:$0xff]
          %v946 = vld [vmem:[#allocation2 + $0x8] sm:$0xff]
          %v947 = vsel %vm895, %v945, 0.0
          %v948 = vsel %vm895, %v946, 0.0
          %v949 = vadd.f32 %v947, %v948
          %950 = vadd.xlane.f32.xlu0 %v949
          %v951 = vpop.xlane.xlu0 %950
          %v952 = vrot.slane %v951, 4
          %v953 = vadd.f32 %v951, %v952
          %v954 = vrot.slane %v953, 2
          %v955 = vadd.f32 %v953, %v954
          %v956 = vrot.slane %v955, 1
          %v957 = vadd.f32 %v955, %v956
          %s958 = vtos %v957
          %vm959 = vcmp.eq.s32.totalorder %v944, 0
          %v960 = vstv %s958
          %v961 = vsel %vm959, %v960, 0.0
          %v962 = vld [vmem:[%s898] sm:$0xff]
          %v963 = vld [vmem:[%s898 + $0x8] sm:$0xff]
          %v964 = vsel %vm895, %v962, 0.0
          %v965 = vsel %vm895, %v963, 0.0
          %v966 = vadd.f32 %v964, %v965
          %967 = vadd.xlane.f32.xlu0 %v966
          %v968 = vpop.xlane.xlu0 %967
          %v969 = vrot.slane %v968, 4
          %v970 = vadd.f32 %v968, %v969
          %v971 = vrot.slane %v970, 2
          %v972 = vadd.f32 %v970, %v971
          %v973 = vrot.slane %v972, 1
          %v974 = vadd.f32 %v972, %v973
          %s975 = vtos %v974
          %vm976 = vcmp.eq.s32.totalorder %v944, 1
          %v977 = vstv %s975
          %v978 = vsel %vm976, %v977, %v961
          %v979 = vld [vmem:[%s905] sm:$0xff]
          %v980 = vld [vmem:[%s905 + $0x8] sm:$0xff]
          %v981 = vsel %vm895, %v979, 0.0
          %v982 = vsel %vm895, %v980, 0.0
          %v983 = vadd.f32 %v981, %v982
          %984 = vadd.xlane.f32.xlu0 %v983
          %v985 = vpop.xlane.xlu0 %984
          %v986 = vrot.slane %v985, 4
          %v987 = vadd.f32 %v985, %v986
          %v988 = vrot.slane %v987, 2
          %v989 = vadd.f32 %v987, %v988
          %v990 = vrot.slane %v989, 1
          %v991 = vadd.f32 %v989, %v990
          %s992 = vtos %v991
          %vm993 = vcmp.eq.s32.totalorder %v944, 2
          %v994 = vstv %s992
          %v995 = vsel %vm993, %v994, %v978
          %v996 = vld [vmem:[%s912] sm:$0xff]
          %v997 = vld [vmem:[%s912 + $0x8] sm:$0xff]
          %v998 = vsel %vm895, %v996, 0.0
          %v999 = vsel %vm895, %v997, 0.0
          %v1000 = vadd.f32 %v998, %v999
          %1001 = vadd.xlane.f32.xlu0 %v1000
          %v1002 = vpop.xlane.xlu0 %1001
          %v1003 = vrot.slane %v1002, 4
          %v1004 = vadd.f32 %v1002, %v1003
          %v1005 = vrot.slane %v1004, 2
          %v1006 = vadd.f32 %v1004, %v1005
          %v1007 = vrot.slane %v1006, 1
          %v1008 = vadd.f32 %v1006, %v1007
          %s1009 = vtos %v1008
          %vm1010 = vcmp.eq.s32.totalorder %v944, 3
          %v1011 = vstv %s1009
          %v1012 = vsel %vm1010, %v1011, %v995
          %v1013 = vld [vmem:[%s919] sm:$0xff]
          %v1014 = vld [vmem:[%s919 + $0x8] sm:$0xff]
          %v1015 = vsel %vm895, %v1013, 0.0
          %v1016 = vsel %vm895, %v1014, 0.0
          %v1017 = vadd.f32 %v1015, %v1016
          %1018 = vadd.xlane.f32.xlu0 %v1017
          %v1019 = vpop.xlane.xlu0 %1018
          %v1020 = vrot.slane %v1019, 4
          %v1021 = vadd.f32 %v1019, %v1020
          %v1022 = vrot.slane %v1021, 2
          %v1023 = vadd.f32 %v1021, %v1022
          %v1024 = vrot.slane %v1023, 1
          %v1025 = vadd.f32 %v1023, %v1024
          %s1026 = vtos %v1025
          %vm1027 = vcmp.eq.s32.totalorder %v944, 4
          %v1028 = vstv %s1026
          %v1029 = vsel %vm1027, %v1028, %v1012
          %v1030 = vld [vmem:[%s926] sm:$0xff]
          %v1031 = vld [vmem:[%s926 + $0x8] sm:$0xff]
          %v1032 = vsel %vm895, %v1030, 0.0
          %v1033 = vsel %vm895, %v1031, 0.0
          %v1034 = vadd.f32 %v1032, %v1033
          %1035 = vadd.xlane.f32.xlu0 %v1034
          %v1036 = vpop.xlane.xlu0 %1035
          %v1037 = vrot.slane %v1036, 4
          %v1038 = vadd.f32 %v1036, %v1037
          %v1039 = vrot.slane %v1038, 2
          %v1040 = vadd.f32 %v1038, %v1039
          %v1041 = vrot.slane %v1040, 1
          %v1042 = vadd.f32 %v1040, %v1041
          %s1043 = vtos %v1042
          %vm1044 = vcmp.eq.s32.totalorder %v944, 5
          %v1045 = vstv %s1043
          %v1046 = vsel %vm1044, %v1045, %v1029
          %v1047 = vld [vmem:[%s933] sm:$0xff]
          %v1048 = vld [vmem:[%s933 + $0x8] sm:$0xff]
          %v1049 = vsel %vm895, %v1047, 0.0
          %v1050 = vsel %vm895, %v1048, 0.0
          %v1051 = vadd.f32 %v1049, %v1050
          %1052 = vadd.xlane.f32.xlu0 %v1051
          %v1053 = vpop.xlane.xlu0 %1052
          %v1054 = vrot.slane %v1053, 4
          %v1055 = vadd.f32 %v1053, %v1054
          %v1056 = vrot.slane %v1055, 2
          %v1057 = vadd.f32 %v1055, %v1056
          %v1058 = vrot.slane %v1057, 1
          %v1059 = vadd.f32 %v1057, %v1058
          %s1060 = vtos %v1059
          %vm1061 = vcmp.eq.s32.totalorder %v944, 6
          %v1062 = vstv %s1060
          %v1063 = vsel %vm1061, %v1062, %v1046
          %1064 = vst [vmem:[%s734] sm:$0xff] %v1063
        $region104: #{tpu_custom_call.1} parent=59 // pred_fallthru
          _
        %s1065 = sand.u32 %s333, 1
        %s1066 = scalar_lea.sflag [#allocation6], %s1065
        %s1067 = sand.u32 %s333, 1
        %s1068 = smul.addr %s1067, 8
        %s1069 = scalar_lea.vmem [#allocation19], %s1068
        // Predicated region
        $region105: #{tpu_custom_call.1} parent=59 // pred_check
          %p1070 = pneg %p343
        $region106: #{tpu_custom_call.1} parent=59 // pred_check_branch
          %1072 = sbr.rel (%p1070) target = $region108
        $region107: #{tpu_custom_call.1} parent=59 // pred_region
          %s1074 = ssub.s32 128, 128
          %1075 = vsyncadd %s1066, %s1074
          %s1076 = smul.addr %s44, 128
          %s1077 = scalar_lea.hbm %s10, %s1076
          %s1079 = sshll.u32 %s1069, 4
          %s1080 = int_to_ptr.vmem [resolvable:$true] %s1079
          %1082 = dma.vmem_to_hbm [thread:$0]  %s1080, 128, %s1077, %s1066
        $region108: #{tpu_custom_call.1} parent=59 // pred_fallthru
          _
      $region60: #{tpu_custom_call.1} parent=5 // pred_fallthru
        _
      %p1083 = scmp.le.s32.totalorder 2, %s35
      // Predicated region
      $region109: #{tpu_custom_call.1} parent=5 // pred_check
        %p1084 = pneg %p1083
      $region110: #{tpu_custom_call.1} parent=5 // pred_check_branch
        %1086 = sbr.rel (%p1084) target = $region112
      $region111: #{tpu_custom_call.1} parent=5 // pred_region
        %s1087 = ssub.s32 %s35, 2
        // Predicated region
        $region113: #{tpu_custom_call.1} parent=111 // pred_check
          %p1088 = pneg %p349
        $region114: #{tpu_custom_call.1} parent=111 // pred_check_branch
          %1090 = sbr.rel (%p1088) target = $region116
        $region115: #{tpu_custom_call.1} parent=111 // pred_region
          %s1091 = sand.u32 %s334, 1
          %s1092 = scalar_lea.sflag [#allocation6], %s1091
          %s1093 = sand.u32 %s334, 1
          %s1094 = smul.addr %s1093, 8
          %s1095 = scalar_lea.vmem [#allocation19], %s1094
          %1096 = dma.done %s1092, 128
        $region116: #{tpu_custom_call.1} parent=111 // pred_fallthru
          _
      $region112: #{tpu_custom_call.1} parent=5 // pred_fallthru
        _
    $region6: #{tpu_custom_call.1} parent=1 // loop_footer
      %s39 = sadd.s32 1, %s35
    $region7: #{tpu_custom_call.1} parent=1 // loop_footer_branch
      %34 = sbr.rel target = $region3
    $region8: #{tpu_custom_call.1} parent=1 // loop_exit
      _
    %1097 = vsyncpa [#allocation5], 1
    %s1098 = scalar_lea.sflag [#allocation5], 1
    %1099 = vsyncpa %s1098, 1
    %1100 = vsyncpa [#allocation8], 1
    %s1101 = scalar_lea.sflag [#allocation8], 1
    %1102 = vsyncpa %s1101, 1
    %1103 = vsyncpa [#allocation11], 1
    %s1104 = scalar_lea.sflag [#allocation11], 1
    %1105 = vsyncpa %s1104, 1
    %1106 = vsyncpa [#allocation14], 1
    %s1107 = scalar_lea.sflag [#allocation14], 1
    %1108 = vsyncpa %s1107, 1
    %1109 = vsyncpa [#allocation17], 1
    %s1110 = scalar_lea.sflag [#allocation17], 1
    %1111 = vsyncpa %s1110, 1
    %1112 = vsyncpa [#allocation6], 1
    %s1113 = scalar_lea.sflag [#allocation6], 1
    %1114 = vsyncpa %s1113, 1

</llo_original>
